<compile_context>
chip_gen: v5e
topology: v5e:2x2
jax: 0.10.0
libtpu: 0.0.40
codegen_flags: <defaults>
</compile_context>

<pallas_src>
import jax
import jax.numpy as jnp
from jax.experimental import pallas as pl
from jax.experimental.pallas import tpu as pltpu


def _round_up(x: int, m: int) -> int:
    return ((x + m - 1) // m) * m


def make_lstm_kernel(num_layers: int, hidden_dim: int, seq_len: int,
                     tile_b: int, sub_b: int, n_sub: int):
    """Fused multi-layer LSTM + FC kernel for one batch tile of TB rows."""
    H, T, TB, SB = hidden_dim, seq_len, tile_b, sub_b

    def kernel(x_ref, len_ref, *rest):
        # rest = [w_ih_0, w_hh_0, b_0, ..., w_ih_{L-1}, w_hh_{L-1}, b_{L-1},
        #         fc_w, fc_b, out_ref, hbuf, gbuf]
        w_ih = [rest[3 * l + 0] for l in range(num_layers)]
        w_hh = [rest[3 * l + 1] for l in range(num_layers)]
        bias = [rest[3 * l + 2] for l in range(num_layers)]
        fc_w = rest[3 * num_layers + 0]
        fc_b = rest[3 * num_layers + 1]
        out_ref = rest[3 * num_layers + 2]
        hbuf = rest[3 * num_layers + 3]      # (T*TB, H)  VMEM: layer output over time
        gbuf = rest[3 * num_layers + 4]      # (T*TB, 4H) VMEM: hoisted input projection

        # Hoisted loop invariants.
        lens = len_ref[...]                                         # (TB, 1) int32
        lens_sub = [lens[s * SB:(s + 1) * SB, :] for s in range(n_sub)]

        # Final-state accumulators (off the recurrent chain).  Padded rows have
        # length 0, never match t+1 == len, and stay zero.
        h_fin = [jnp.zeros((SB, H), jnp.float32) for _ in range(n_sub)]

        # Collapse (T, TB, D) -> (T*TB, D); TB is a multiple of 8 so this does
        # not cross (8,128) tile boundaries.
        x_flat = x_ref[...].reshape(T * TB, x_ref.shape[-1])

        for l in range(num_layers):                                  # static layer loop
            # ---- Phase 1 (off the recurrence): batched input projection ----
            # One (T*TB, D_in) @ (D_in, 4H) MXU matmul + bias for the whole
            # layer, parked in VMEM to keep vreg live ranges bounded.
            layer_in = x_flat if l == 0 else hbuf[...]
            gbuf[...] = (
                jnp.dot(layer_in, w_ih[l][...], preferred_element_type=jnp.float32)
                + bias[l][...]
            )

            # ---- Phase 2: serial recurrence, interleaved sub-tiles ---------
            w_hh_l = w_hh[l][...]                                    # (H, 4H), read once
            last = (l == num_layers - 1)
            h = [jnp.zeros((SB, H), jnp.float32) for _ in range(n_sub)]
            c = [jnp.zeros((SB, H), jnp.float32) for _ in range(n_sub)]
            for t in range(T):                                       # fully unrolled
                for s in range(n_sub):                               # independent chains
                    row = t * TB + s * SB                            # static, 8-aligned
                    gates = gbuf[row:row + SB, :] + jnp.dot(
                        h[s], w_hh_l, preferred_element_type=jnp.float32)  # (SB, 4H)

                    # One whole-slab sigmoid; tanh only on the g-gate slice.
                    # PyTorch gate order: input, forget, cell(g), output.
                    sig = jax.nn.sigmoid(gates)
                    i_g = sig[:, 0 * H:1 * H]
                    f_g = sig[:, 1 * H:2 * H]
                    o_g = sig[:, 3 * H:4 * H]
                    g_g = jnp.tanh(gates[:, 2 * H:3 * H])

                    c[s] = f_g * c[s] + i_g * g_g
                    h[s] = o_g * jnp.tanh(c[s])

                    if not last:
                        # Feed the next layer (unmasked values past a row's
                        # length never reach the selected final state).
                        hbuf[row:row + SB, :] = h[s]
                    else:
                        # Latch hn[-1] at t == lengths-1 (off the h->h chain).
                        h_fin[s] = jnp.where(lens_sub[s] == (t + 1), h[s], h_fin[s])

        h_last = h_fin[0] if n_sub == 1 else jnp.concatenate(h_fin, axis=0)
        # fc(hn[-1]): (TB, H) @ (H, out) + (1, out).
        # TODO(synk): out_dim=1 stores are lane-masked; pad to 128 lanes if out_dim scales.
        out_ref[...] = (
            jnp.dot(h_last, fc_w[...], preferred_element_type=jnp.float32)
            + fc_b[...]
        )

    return kernel


def lstm_classifier_forward(x, lengths, params):
    """x: (B, T, D) float32 batch_first, lengths: (B,) int."""
    B, T, D = x.shape
    num_layers = len(params["w_ih"])
    H = params["w_hh"][0].shape[0]
    out_dim = params["fc_w"].shape[1]

    # Batch tiling: pad to 8-sublane multiples; at B>8 split into 2 grid tiles
    # (so v7x's two TensorCores each take one), and inside a tile interleave
    # two 8-row sub-chains when the tile is a multiple of 16.
    if B <= 8:
        Bp, grid_n = 8, 1
    else:
        Bp, grid_n = _round_up(B, 16), 2
    TB = Bp // grid_n
    n_sub = 2 if (TB >= 16 and TB % 16 == 0) else 1
    SB = TB // n_sub
    pad = Bp - B

    x_tm = jnp.transpose(x, (1, 0, 2)).astype(jnp.float32)           # (T, B, D)
    if pad:
        x_tm = jnp.pad(x_tm, ((0, 0), (0, pad), (0, 0)))             # (T, Bp, D)

    lens = lengths.astype(jnp.int32)
    if pad:
        # Padded rows get length 0 -> final state stays zero, sliced off below.
        lens = jnp.concatenate([lens, jnp.zeros((pad,), jnp.int32)])
    len2d = lens.reshape(Bp, 1)

    inputs = [x_tm, len2d]
    in_specs = [
        pl.BlockSpec((T, TB, D), lambda i: (0, i, 0)),
        pl.BlockSpec((TB, 1), lambda i: (i, 0)),
    ]
    # Weights: full blocks, constant index_map -> resident across grid steps.
    # TODO(synk): at real H stream per-layer weights from HBM (pl.ANY + DMA) for v7x VMEM.
    for l in range(num_layers):
        for w in (params["w_ih"][l], params["w_hh"][l], params["b"][l]):
            inputs.append(w)
            in_specs.append(pl.BlockSpec(w.shape, lambda i: (0, 0)))
    for w in (params["fc_w"], params["fc_b"]):
        inputs.append(w)
        in_specs.append(pl.BlockSpec(w.shape, lambda i: (0, 0)))

    kernel = make_lstm_kernel(num_layers, H, T, TB, SB, n_sub)

    out_padded = pl.pallas_call(
        kernel,
        out_shape=jax.ShapeDtypeStruct((Bp, out_dim), jnp.float32),
        grid=(grid_n,),
        in_specs=in_specs,
        out_specs=pl.BlockSpec((TB, out_dim), lambda i: (i, 0)),
        scratch_shapes=[
            pltpu.VMEM((T * TB, H), jnp.float32),        # cross-layer h over time
            pltpu.VMEM((T * TB, 4 * H), jnp.float32),    # hoisted gate projection
        ],
        compiler_params=pltpu.CompilerParams(
            dimension_semantics=("parallel",),
            # vmem_limit_bytes: leave default at toy sizes; raise explicitly
            # when H grows (v5e scoped default is only 16 MiB).
        ),
    )(*inputs)
    return out_padded[:B]


def init_params(key, input_dim, hidden_dim, num_layers, output_dim):
    """Deterministic synthetic parameters, PyTorch-style uniform(-1/sqrt(H), 1/sqrt(H)).

    Weights are stored pre-transposed so the kernel does plain (M, K) @ (K, N):
      w_ih[l]: (D_in_l, 4H)   w_hh[l]: (H, 4H)   b[l]: (1, 4H) = b_ih + b_hh
      fc_w: (H, out)          fc_b: (1, out)
    """
    k = 1.0 / jnp.sqrt(jnp.float32(hidden_dim))
    keys = jax.random.split(key, 4 * num_layers + 2)
    w_ih, w_hh, b = [], [], []
    for l in range(num_layers):
        d_in = input_dim if l == 0 else hidden_dim
        w_ih.append(jax.random.uniform(keys[4 * l + 0], (d_in, 4 * hidden_dim),
                                       jnp.float32, -k, k))
        w_hh.append(jax.random.uniform(keys[4 * l + 1], (hidden_dim, 4 * hidden_dim),
                                       jnp.float32, -k, k))
        b_ih = jax.random.uniform(keys[4 * l + 2], (1, 4 * hidden_dim),
                                  jnp.float32, -k, k)
        b_hh = jax.random.uniform(keys[4 * l + 3], (1, 4 * hidden_dim),
                                  jnp.float32, -k, k)
        b.append(b_ih + b_hh)
    fc_w = jax.random.uniform(keys[-2], (hidden_dim, output_dim), jnp.float32, -k, k)
    fc_b = jax.random.uniform(keys[-1], (1, output_dim), jnp.float32, -k, k)
    return {"w_ih": w_ih, "w_hh": w_hh, "b": b, "fc_w": fc_w, "fc_b": fc_b}


def reference_forward(x, lengths, params):
    """Pure-JAX reference matching torch pack_padded_sequence + LSTM + fc(hn[-1])."""
    B, T, _ = x.shape
    num_layers = len(params["w_ih"])
    H = params["w_hh"][0].shape[0]
    h = jnp.zeros((num_layers, B, H), jnp.float32)
    c = jnp.zeros((num_layers, B, H), jnp.float32)
    for t in range(T):
        mask = (t < lengths).reshape(B, 1)
        inp = x[:, t, :]
        new_h, new_c = [], []
        for l in range(num_layers):
            gates = inp @ params["w_ih"][l] + h[l] @ params["w_hh"][l] + params["b"][l]
            i_g = jax.nn.sigmoid(gates[:, 0 * H:1 * H])
            f_g = jax.nn.sigmoid(gates[:, 1 * H:2 * H])
            g_g = jnp.tanh(gates[:, 2 * H:3 * H])
            o_g = jax.nn.sigmoid(gates[:, 3 * H:4 * H])
            c_new = f_g * c[l] + i_g * g_g
            h_new = o_g * jnp.tanh(c_new)
            h_upd = jnp.where(mask, h_new, h[l])
            c_upd = jnp.where(mask, c_new, c[l])
            new_h.append(h_upd)
            new_c.append(c_upd)
            inp = h_upd
        h = jnp.stack(new_h)
        c = jnp.stack(new_c)
    return h[-1] @ params["fc_w"] + params["fc_b"]


if __name__ == "__main__":
    # Small shapes consistent with the module's forward:
    # batch=4, seq=8, input_dim=16, hidden_dim=32, num_layers=2, output_dim=1.
    B, T, D, H, L, OUT = 4, 8, 16, 32, 2, 1

    key = jax.random.PRNGKey(0)
    kx, kp = jax.random.split(key)
    x = jax.random.normal(kx, (B, T, D), jnp.float32)
    lengths = jnp.array([8, 5, 3, 6], dtype=jnp.int32)   # variable-length sequences
    params = init_params(kp, D, H, L, OUT)

    out = lstm_classifier_forward(x, lengths, params)
    out = jax.block_until_ready(out)

    ref = jax.block_until_ready(reference_forward(x, lengths, params))
    assert out.shape == (B, OUT)
    assert jnp.allclose(out, ref, atol=1e-5, rtol=1e-5), (out, ref)

    print("KERNEL_OK")
</pallas_src>

<mosaic_0001>
module attributes {stable_mosaic.version = 11 : i64} {
  func.func @kernel(%arg0: i32, %arg1: memref<8x8x16xf32, #tpu.memory_space<vmem>>, %arg2: memref<8x1xi32, #tpu.memory_space<vmem>>, %arg3: memref<16x128xf32, #tpu.memory_space<vmem>>, %arg4: memref<32x128xf32, #tpu.memory_space<vmem>>, %arg5: memref<1x128xf32, #tpu.memory_space<vmem>>, %arg6: memref<32x128xf32, #tpu.memory_space<vmem>>, %arg7: memref<32x128xf32, #tpu.memory_space<vmem>>, %arg8: memref<1x128xf32, #tpu.memory_space<vmem>>, %arg9: memref<32x1xf32, #tpu.memory_space<vmem>>, %arg10: memref<1x1xf32, #tpu.memory_space<vmem>>, %arg11: memref<8x1xf32, #tpu.memory_space<vmem>>, %arg12: memref<64x32xf32, #tpu.memory_space<vmem>>, %arg13: memref<64x128xf32, #tpu.memory_space<vmem>>) attributes {dimension_semantics = [#tpu.dimension_semantics<parallel>], iteration_bounds = array<i64: 1>, scalar_prefetch = 0 : i64, scratch_operands = 2 : i64, tpu.core_type = #tpu.core_type<tc>, window_params = [{transform_indices = @transform_0, window_bounds = array<i64: 8, 8, 16>}, {transform_indices = @transform_1, window_bounds = array<i64: 8, 1>}, {pipeline_mode = #tpu.pipeline_mode<synchronous>, transform_indices = @transform_2, window_bounds = array<i64: 16, 128>}, {pipeline_mode = #tpu.pipeline_mode<synchronous>, transform_indices = @transform_3, window_bounds = array<i64: 32, 128>}, {pipeline_mode = #tpu.pipeline_mode<synchronous>, transform_indices = @transform_4, window_bounds = array<i64: 1, 128>}, {pipeline_mode = #tpu.pipeline_mode<synchronous>, transform_indices = @transform_5, window_bounds = array<i64: 32, 128>}, {pipeline_mode = #tpu.pipeline_mode<synchronous>, transform_indices = @transform_6, window_bounds = array<i64: 32, 128>}, {pipeline_mode = #tpu.pipeline_mode<synchronous>, transform_indices = @transform_7, window_bounds = array<i64: 1, 128>}, {pipeline_mode = #tpu.pipeline_mode<synchronous>, transform_indices = @transform_8, window_bounds = array<i64: 32, 1>}, {pipeline_mode = #tpu.pipeline_mode<synchronous>, transform_indices = @transform_9, window_bounds = array<i64: 1, 1>}, {transform_indices = @transform_10, window_bounds = array<i64: 8, 1>}]} {
    %c0 = arith.constant 0 : index
    %c0_0 = arith.constant 0 : index
    %0 = vector.load %arg2[%c0, %c0_0] : memref<8x1xi32, #tpu.memory_space<vmem>>, vector<8x1xi32>
    %cst = arith.constant 0.000000e+00 : f32
    %1 = vector.broadcast %cst : f32 to vector<8x32xf32>
    %c0_1 = arith.constant 0 : index
    %c0_2 = arith.constant 0 : index
    %c0_3 = arith.constant 0 : index
    %2 = vector.load %arg1[%c0_1, %c0_2, %c0_3] : memref<8x8x16xf32, #tpu.memory_space<vmem>>, vector<8x8x16xf32>
    %3 = vector.shape_cast %2 : vector<8x8x16xf32> to vector<64x16xf32>
    %c0_4 = arith.constant 0 : index
    %c0_5 = arith.constant 0 : index
    %4 = vector.load %arg3[%c0_4, %c0_5] : memref<16x128xf32, #tpu.memory_space<vmem>>, vector<16x128xf32>
    %cst_6 = arith.constant dense<0.000000e+00> : vector<64x128xf32>
    %5 = tpu.matmul %3, %4, %cst_6 {dimension_numbers = #tpu.dot_dimension_numbers<[1], [0], [0], [1], [0, 0, 1, 1], [], []>} : vector<64x16xf32>, vector<16x128xf32>, vector<64x128xf32> -> vector<64x128xf32>
    %c0_7 = arith.constant 0 : index
    %c0_8 = arith.constant 0 : index
    %6 = vector.load %arg5[%c0_7, %c0_8] : memref<1x128xf32, #tpu.memory_space<vmem>>, vector<1x128xf32>
    %7 = vector.broadcast %6 : vector<1x128xf32> to vector<64x128xf32>
    %8 = arith.addf %5, %7 : vector<64x128xf32>
    %c0_9 = arith.constant 0 : index
    %c0_10 = arith.constant 0 : index
    %9 = vector.load %arg13[%c0_9, %c0_10] : memref<64x128xf32, #tpu.memory_space<vmem>>, vector<64x128xf32>
    tpu.vector_store %arg13[%c0_9, %c0_10], %8 {strides = array<i32>} : memref<64x128xf32, #tpu.memory_space<vmem>>, vector<64x128xf32>,
    %c0_11 = arith.constant 0 : index
    %c0_12 = arith.constant 0 : index
    %10 = vector.load %arg4[%c0_11, %c0_12] : memref<32x128xf32, #tpu.memory_space<vmem>>, vector<32x128xf32>
    %cst_13 = arith.constant 0.000000e+00 : f32
    %11 = vector.broadcast %cst_13 : f32 to vector<8x32xf32>
    %cst_14 = arith.constant 0.000000e+00 : f32
    %12 = vector.broadcast %cst_14 : f32 to vector<8x32xf32>
    %c0_15 = arith.constant 0 : index
    %c0_16 = arith.constant 0 : index
    %13 = vector.load %arg13[%c0_15, %c0_16] : memref<64x128xf32, #tpu.memory_space<vmem>>, vector<8x128xf32>
    %cst_17 = arith.constant dense<0.000000e+00> : vector<8x128xf32>
    %14 = tpu.matmul %11, %10, %cst_17 {dimension_numbers = #tpu.dot_dimension_numbers<[1], [0], [0], [1], [0, 0, 1, 1], [], []>} : vector<8x32xf32>, vector<32x128xf32>, vector<8x128xf32> -> vector<8x128xf32>
    %15 = arith.addf %13, %14 : vector<8x128xf32>
    %16 = arith.negf %15 : vector<8x128xf32>
    %17 = math.exp %16 : vector<8x128xf32>
    %cst_18 = arith.constant 1.000000e+00 : f32
    %18 = vector.broadcast %cst_18 : f32 to vector<8x128xf32>
    %19 = arith.addf %18, %17 : vector<8x128xf32>
    %20 = arith.divf %18, %19 : vector<8x128xf32>
    %21 = vector.extract_strided_slice %20 {offsets = [0, 0], sizes = [8, 32], strides = [1, 1]} : vector<8x128xf32> to vector<8x32xf32>
    %22 = vector.extract_strided_slice %20 {offsets = [0, 32], sizes = [8, 32], strides = [1, 1]} : vector<8x128xf32> to vector<8x32xf32>
    %23 = vector.extract_strided_slice %20 {offsets = [0, 96], sizes = [8, 32], strides = [1, 1]} : vector<8x128xf32> to vector<8x32xf32>
    %24 = vector.extract_strided_slice %15 {offsets = [0, 64], sizes = [8, 32], strides = [1, 1]} : vector<8x128xf32> to vector<8x32xf32>
    %25 = math.tanh %24 : vector<8x32xf32>
    %26 = arith.mulf %22, %12 : vector<8x32xf32>
    %27 = arith.mulf %21, %25 : vector<8x32xf32>
    %28 = arith.addf %26, %27 : vector<8x32xf32>
    %29 = math.tanh %28 : vector<8x32xf32>
    %30 = arith.mulf %23, %29 : vector<8x32xf32>
    %c0_19 = arith.constant 0 : index
    %c0_20 = arith.constant 0 : index
    %31 = vector.load %arg12[%c0_19, %c0_20] : memref<64x32xf32, #tpu.memory_space<vmem>>, vector<8x32xf32>
    tpu.vector_store %arg12[%c0_19, %c0_20], %30 {strides = array<i32>} : memref<64x32xf32, #tpu.memory_space<vmem>>, vector<8x32xf32>,
    %c8 = arith.constant 8 : index
    %c0_21 = arith.constant 0 : index
    %32 = vector.load %arg13[%c8, %c0_21] : memref<64x128xf32, #tpu.memory_space<vmem>>, vector<8x128xf32>
    %cst_22 = arith.constant dense<0.000000e+00> : vector<8x128xf32>
    %33 = tpu.matmul %30, %10, %cst_22 {dimension_numbers = #tpu.dot_dimension_numbers<[1], [0], [0], [1], [0, 0, 1, 1], [], []>} : vector<8x32xf32>, vector<32x128xf32>, vector<8x128xf32> -> vector<8x128xf32>
    %34 = arith.addf %32, %33 : vector<8x128xf32>
    %35 = arith.negf %34 : vector<8x128xf32>
    %36 = math.exp %35 : vector<8x128xf32>
    %cst_23 = arith.constant 1.000000e+00 : f32
    %37 = vector.broadcast %cst_23 : f32 to vector<8x128xf32>
    %38 = arith.addf %37, %36 : vector<8x128xf32>
    %39 = arith.divf %37, %38 : vector<8x128xf32>
    %40 = vector.extract_strided_slice %39 {offsets = [0, 0], sizes = [8, 32], strides = [1, 1]} : vector<8x128xf32> to vector<8x32xf32>
    %41 = vector.extract_strided_slice %39 {offsets = [0, 32], sizes = [8, 32], strides = [1, 1]} : vector<8x128xf32> to vector<8x32xf32>
    %42 = vector.extract_strided_slice %39 {offsets = [0, 96], sizes = [8, 32], strides = [1, 1]} : vector<8x128xf32> to vector<8x32xf32>
    %43 = vector.extract_strided_slice %34 {offsets = [0, 64], sizes = [8, 32], strides = [1, 1]} : vector<8x128xf32> to vector<8x32xf32>
    %44 = math.tanh %43 : vector<8x32xf32>
    %45 = arith.mulf %41, %28 : vector<8x32xf32>
    %46 = arith.mulf %40, %44 : vector<8x32xf32>
    %47 = arith.addf %45, %46 : vector<8x32xf32>
    %48 = math.tanh %47 : vector<8x32xf32>
    %49 = arith.mulf %42, %48 : vector<8x32xf32>
    %c8_24 = arith.constant 8 : index
    %c0_25 = arith.constant 0 : index
    %50 = vector.load %arg12[%c8_24, %c0_25] : memref<64x32xf32, #tpu.memory_space<vmem>>, vector<8x32xf32>
    tpu.vector_store %arg12[%c8_24, %c0_25], %49 {strides = array<i32>} : memref<64x32xf32, #tpu.memory_space<vmem>>, vector<8x32xf32>,
    %c16 = arith.constant 16 : index
    %c0_26 = arith.constant 0 : index
    %51 = vector.load %arg13[%c16, %c0_26] : memref<64x128xf32, #tpu.memory_space<vmem>>, vector<8x128xf32>
    %cst_27 = arith.constant dense<0.000000e+00> : vector<8x128xf32>
    %52 = tpu.matmul %49, %10, %cst_27 {dimension_numbers = #tpu.dot_dimension_numbers<[1], [0], [0], [1], [0, 0, 1, 1], [], []>} : vector<8x32xf32>, vector<32x128xf32>, vector<8x128xf32> -> vector<8x128xf32>
    %53 = arith.addf %51, %52 : vector<8x128xf32>
    %54 = arith.negf %53 : vector<8x128xf32>
    %55 = math.exp %54 : vector<8x128xf32>
    %cst_28 = arith.constant 1.000000e+00 : f32
    %56 = vector.broadcast %cst_28 : f32 to vector<8x128xf32>
    %57 = arith.addf %56, %55 : vector<8x128xf32>
    %58 = arith.divf %56, %57 : vector<8x128xf32>
    %59 = vector.extract_strided_slice %58 {offsets = [0, 0], sizes = [8, 32], strides = [1, 1]} : vector<8x128xf32> to vector<8x32xf32>
    %60 = vector.extract_strided_slice %58 {offsets = [0, 32], sizes = [8, 32], strides = [1, 1]} : vector<8x128xf32> to vector<8x32xf32>
    %61 = vector.extract_strided_slice %58 {offsets = [0, 96], sizes = [8, 32], strides = [1, 1]} : vector<8x128xf32> to vector<8x32xf32>
    %62 = vector.extract_strided_slice %53 {offsets = [0, 64], sizes = [8, 32], strides = [1, 1]} : vector<8x128xf32> to vector<8x32xf32>
    %63 = math.tanh %62 : vector<8x32xf32>
    %64 = arith.mulf %60, %47 : vector<8x32xf32>
    %65 = arith.mulf %59, %63 : vector<8x32xf32>
    %66 = arith.addf %64, %65 : vector<8x32xf32>
    %67 = math.tanh %66 : vector<8x32xf32>
    %68 = arith.mulf %61, %67 : vector<8x32xf32>
    %c16_29 = arith.constant 16 : index
    %c0_30 = arith.constant 0 : index
    %69 = vector.load %arg12[%c16_29, %c0_30] : memref<64x32xf32, #tpu.memory_space<vmem>>, vector<8x32xf32>
    tpu.vector_store %arg12[%c16_29, %c0_30], %68 {strides = array<i32>} : memref<64x32xf32, #tpu.memory_space<vmem>>, vector<8x32xf32>,
    %c24 = arith.constant 24 : index
    %c0_31 = arith.constant 0 : index
    %70 = vector.load %arg13[%c24, %c0_31] : memref<64x128xf32, #tpu.memory_space<vmem>>, vector<8x128xf32>
    %cst_32 = arith.constant dense<0.000000e+00> : vector<8x128xf32>
    %71 = tpu.matmul %68, %10, %cst_32 {dimension_numbers = #tpu.dot_dimension_numbers<[1], [0], [0], [1], [0, 0, 1, 1], [], []>} : vector<8x32xf32>, vector<32x128xf32>, vector<8x128xf32> -> vector<8x128xf32>
    %72 = arith.addf %70, %71 : vector<8x128xf32>
    %73 = arith.negf %72 : vector<8x128xf32>
    %74 = math.exp %73 : vector<8x128xf32>
    %cst_33 = arith.constant 1.000000e+00 : f32
    %75 = vector.broadcast %cst_33 : f32 to vector<8x128xf32>
    %76 = arith.addf %75, %74 : vector<8x128xf32>
    %77 = arith.divf %75, %76 : vector<8x128xf32>
    %78 = vector.extract_strided_slice %77 {offsets = [0, 0], sizes = [8, 32], strides = [1, 1]} : vector<8x128xf32> to vector<8x32xf32>
    %79 = vector.extract_strided_slice %77 {offsets = [0, 32], sizes = [8, 32], strides = [1, 1]} : vector<8x128xf32> to vector<8x32xf32>
    %80 = vector.extract_strided_slice %77 {offsets = [0, 96], sizes = [8, 32], strides = [1, 1]} : vector<8x128xf32> to vector<8x32xf32>
    %81 = vector.extract_strided_slice %72 {offsets = [0, 64], sizes = [8, 32], strides = [1, 1]} : vector<8x128xf32> to vector<8x32xf32>
    %82 = math.tanh %81 : vector<8x32xf32>
    %83 = arith.mulf %79, %66 : vector<8x32xf32>
    %84 = arith.mulf %78, %82 : vector<8x32xf32>
    %85 = arith.addf %83, %84 : vector<8x32xf32>
    %86 = math.tanh %85 : vector<8x32xf32>
    %87 = arith.mulf %80, %86 : vector<8x32xf32>
    %c24_34 = arith.constant 24 : index
    %c0_35 = arith.constant 0 : index
    %88 = vector.load %arg12[%c24_34, %c0_35] : memref<64x32xf32, #tpu.memory_space<vmem>>, vector<8x32xf32>
    tpu.vector_store %arg12[%c24_34, %c0_35], %87 {strides = array<i32>} : memref<64x32xf32, #tpu.memory_space<vmem>>, vector<8x32xf32>,
    %c32 = arith.constant 32 : index
    %c0_36 = arith.constant 0 : index
    %89 = vector.load %arg13[%c32, %c0_36] : memref<64x128xf32, #tpu.memory_space<vmem>>, vector<8x128xf32>
    %cst_37 = arith.constant dense<0.000000e+00> : vector<8x128xf32>
    %90 = tpu.matmul %87, %10, %cst_37 {dimension_numbers = #tpu.dot_dimension_numbers<[1], [0], [0], [1], [0, 0, 1, 1], [], []>} : vector<8x32xf32>, vector<32x128xf32>, vector<8x128xf32> -> vector<8x128xf32>
    %91 = arith.addf %89, %90 : vector<8x128xf32>
    %92 = arith.negf %91 : vector<8x128xf32>
    %93 = math.exp %92 : vector<8x128xf32>
    %cst_38 = arith.constant 1.000000e+00 : f32
    %94 = vector.broadcast %cst_38 : f32 to vector<8x128xf32>
    %95 = arith.addf %94, %93 : vector<8x128xf32>
    %96 = arith.divf %94, %95 : vector<8x128xf32>
    %97 = vector.extract_strided_slice %96 {offsets = [0, 0], sizes = [8, 32], strides = [1, 1]} : vector<8x128xf32> to vector<8x32xf32>
    %98 = vector.extract_strided_slice %96 {offsets = [0, 32], sizes = [8, 32], strides = [1, 1]} : vector<8x128xf32> to vector<8x32xf32>
    %99 = vector.extract_strided_slice %96 {offsets = [0, 96], sizes = [8, 32], strides = [1, 1]} : vector<8x128xf32> to vector<8x32xf32>
    %100 = vector.extract_strided_slice %91 {offsets = [0, 64], sizes = [8, 32], strides = [1, 1]} : vector<8x128xf32> to vector<8x32xf32>
    %101 = math.tanh %100 : vector<8x32xf32>
    %102 = arith.mulf %98, %85 : vector<8x32xf32>
    %103 = arith.mulf %97, %101 : vector<8x32xf32>
    %104 = arith.addf %102, %103 : vector<8x32xf32>
    %105 = math.tanh %104 : vector<8x32xf32>
    %106 = arith.mulf %99, %105 : vector<8x32xf32>
    %c32_39 = arith.constant 32 : index
    %c0_40 = arith.constant 0 : index
    %107 = vector.load %arg12[%c32_39, %c0_40] : memref<64x32xf32, #tpu.memory_space<vmem>>, vector<8x32xf32>
    tpu.vector_store %arg12[%c32_39, %c0_40], %106 {strides = array<i32>} : memref<64x32xf32, #tpu.memory_space<vmem>>, vector<8x32xf32>,
    %c40 = arith.constant 40 : index
    %c0_41 = arith.constant 0 : index
    %108 = vector.load %arg13[%c40, %c0_41] : memref<64x128xf32, #tpu.memory_space<vmem>>, vector<8x128xf32>
    %cst_42 = arith.constant dense<0.000000e+00> : vector<8x128xf32>
    %109 = tpu.matmul %106, %10, %cst_42 {dimension_numbers = #tpu.dot_dimension_numbers<[1], [0], [0], [1], [0, 0, 1, 1], [], []>} : vector<8x32xf32>, vector<32x128xf32>, vector<8x128xf32> -> vector<8x128xf32>
    %110 = arith.addf %108, %109 : vector<8x128xf32>
    %111 = arith.negf %110 : vector<8x128xf32>
    %112 = math.exp %111 : vector<8x128xf32>
    %cst_43 = arith.constant 1.000000e+00 : f32
    %113 = vector.broadcast %cst_43 : f32 to vector<8x128xf32>
    %114 = arith.addf %113, %112 : vector<8x128xf32>
    %115 = arith.divf %113, %114 : vector<8x128xf32>
    %116 = vector.extract_strided_slice %115 {offsets = [0, 0], sizes = [8, 32], strides = [1, 1]} : vector<8x128xf32> to vector<8x32xf32>
    %117 = vector.extract_strided_slice %115 {offsets = [0, 32], sizes = [8, 32], strides = [1, 1]} : vector<8x128xf32> to vector<8x32xf32>
    %118 = vector.extract_strided_slice %115 {offsets = [0, 96], sizes = [8, 32], strides = [1, 1]} : vector<8x128xf32> to vector<8x32xf32>
    %119 = vector.extract_strided_slice %110 {offsets = [0, 64], sizes = [8, 32], strides = [1, 1]} : vector<8x128xf32> to vector<8x32xf32>
    %120 = math.tanh %119 : vector<8x32xf32>
    %121 = arith.mulf %117, %104 : vector<8x32xf32>
    %122 = arith.mulf %116, %120 : vector<8x32xf32>
    %123 = arith.addf %121, %122 : vector<8x32xf32>
    %124 = math.tanh %123 : vector<8x32xf32>
    %125 = arith.mulf %118, %124 : vector<8x32xf32>
    %c40_44 = arith.constant 40 : index
    %c0_45 = arith.constant 0 : index
    %126 = vector.load %arg12[%c40_44, %c0_45] : memref<64x32xf32, #tpu.memory_space<vmem>>, vector<8x32xf32>
    tpu.vector_store %arg12[%c40_44, %c0_45], %125 {strides = array<i32>} : memref<64x32xf32, #tpu.memory_space<vmem>>, vector<8x32xf32>,
    %c48 = arith.constant 48 : index
    %c0_46 = arith.constant 0 : index
    %127 = vector.load %arg13[%c48, %c0_46] : memref<64x128xf32, #tpu.memory_space<vmem>>, vector<8x128xf32>
    %cst_47 = arith.constant dense<0.000000e+00> : vector<8x128xf32>
    %128 = tpu.matmul %125, %10, %cst_47 {dimension_numbers = #tpu.dot_dimension_numbers<[1], [0], [0], [1], [0, 0, 1, 1], [], []>} : vector<8x32xf32>, vector<32x128xf32>, vector<8x128xf32> -> vector<8x128xf32>
    %129 = arith.addf %127, %128 : vector<8x128xf32>
    %130 = arith.negf %129 : vector<8x128xf32>
    %131 = math.exp %130 : vector<8x128xf32>
    %cst_48 = arith.constant 1.000000e+00 : f32
    %132 = vector.broadcast %cst_48 : f32 to vector<8x128xf32>
    %133 = arith.addf %132, %131 : vector<8x128xf32>
    %134 = arith.divf %132, %133 : vector<8x128xf32>
    %135 = vector.extract_strided_slice %134 {offsets = [0, 0], sizes = [8, 32], strides = [1, 1]} : vector<8x128xf32> to vector<8x32xf32>
    %136 = vector.extract_strided_slice %134 {offsets = [0, 32], sizes = [8, 32], strides = [1, 1]} : vector<8x128xf32> to vector<8x32xf32>
    %137 = vector.extract_strided_slice %134 {offsets = [0, 96], sizes = [8, 32], strides = [1, 1]} : vector<8x128xf32> to vector<8x32xf32>
    %138 = vector.extract_strided_slice %129 {offsets = [0, 64], sizes = [8, 32], strides = [1, 1]} : vector<8x128xf32> to vector<8x32xf32>
    %139 = math.tanh %138 : vector<8x32xf32>
    %140 = arith.mulf %136, %123 : vector<8x32xf32>
    %141 = arith.mulf %135, %139 : vector<8x32xf32>
    %142 = arith.addf %140, %141 : vector<8x32xf32>
    %143 = math.tanh %142 : vector<8x32xf32>
    %144 = arith.mulf %137, %143 : vector<8x32xf32>
    %c48_49 = arith.constant 48 : index
    %c0_50 = arith.constant 0 : index
    %145 = vector.load %arg12[%c48_49, %c0_50] : memref<64x32xf32, #tpu.memory_space<vmem>>, vector<8x32xf32>
    tpu.vector_store %arg12[%c48_49, %c0_50], %144 {strides = array<i32>} : memref<64x32xf32, #tpu.memory_space<vmem>>, vector<8x32xf32>,
    %c56 = arith.constant 56 : index
    %c0_51 = arith.constant 0 : index
    %146 = vector.load %arg13[%c56, %c0_51] : memref<64x128xf32, #tpu.memory_space<vmem>>, vector<8x128xf32>
    %cst_52 = arith.constant dense<0.000000e+00> : vector<8x128xf32>
    %147 = tpu.matmul %144, %10, %cst_52 {dimension_numbers = #tpu.dot_dimension_numbers<[1], [0], [0], [1], [0, 0, 1, 1], [], []>} : vector<8x32xf32>, vector<32x128xf32>, vector<8x128xf32> -> vector<8x128xf32>
    %148 = arith.addf %146, %147 : vector<8x128xf32>
    %149 = arith.negf %148 : vector<8x128xf32>
    %150 = math.exp %149 : vector<8x128xf32>
    %cst_53 = arith.constant 1.000000e+00 : f32
    %151 = vector.broadcast %cst_53 : f32 to vector<8x128xf32>
    %152 = arith.addf %151, %150 : vector<8x128xf32>
    %153 = arith.divf %151, %152 : vector<8x128xf32>
    %154 = vector.extract_strided_slice %153 {offsets = [0, 0], sizes = [8, 32], strides = [1, 1]} : vector<8x128xf32> to vector<8x32xf32>
    %155 = vector.extract_strided_slice %153 {offsets = [0, 32], sizes = [8, 32], strides = [1, 1]} : vector<8x128xf32> to vector<8x32xf32>
    %156 = vector.extract_strided_slice %153 {offsets = [0, 96], sizes = [8, 32], strides = [1, 1]} : vector<8x128xf32> to vector<8x32xf32>
    %157 = vector.extract_strided_slice %148 {offsets = [0, 64], sizes = [8, 32], strides = [1, 1]} : vector<8x128xf32> to vector<8x32xf32>
    %158 = math.tanh %157 : vector<8x32xf32>
    %159 = arith.mulf %155, %142 : vector<8x32xf32>
    %160 = arith.mulf %154, %158 : vector<8x32xf32>
    %161 = arith.addf %159, %160 : vector<8x32xf32>
    %162 = math.tanh %161 : vector<8x32xf32>
    %163 = arith.mulf %156, %162 : vector<8x32xf32>
    %c56_54 = arith.constant 56 : index
    %c0_55 = arith.constant 0 : index
    %164 = vector.load %arg12[%c56_54, %c0_55] : memref<64x32xf32, #tpu.memory_space<vmem>>, vector<8x32xf32>
    tpu.vector_store %arg12[%c56_54, %c0_55], %163 {strides = array<i32>} : memref<64x32xf32, #tpu.memory_space<vmem>>, vector<8x32xf32>,
    %c0_56 = arith.constant 0 : index
    %c0_57 = arith.constant 0 : index
    %165 = vector.load %arg12[%c0_56, %c0_57] : memref<64x32xf32, #tpu.memory_space<vmem>>, vector<64x32xf32>
    %c0_58 = arith.constant 0 : index
    %c0_59 = arith.constant 0 : index
    %166 = vector.load %arg6[%c0_58, %c0_59] : memref<32x128xf32, #tpu.memory_space<vmem>>, vector<32x128xf32>
    %cst_60 = arith.constant dense<0.000000e+00> : vector<64x128xf32>
    %167 = tpu.matmul %165, %166, %cst_60 {dimension_numbers = #tpu.dot_dimension_numbers<[1], [0], [0], [1], [0, 0, 1, 1], [], []>} : vector<64x32xf32>, vector<32x128xf32>, vector<64x128xf32> -> vector<64x128xf32>
    %c0_61 = arith.constant 0 : index
    %c0_62 = arith.constant 0 : index
    %168 = vector.load %arg8[%c0_61, %c0_62] : memref<1x128xf32, #tpu.memory_space<vmem>>, vector<1x128xf32>
    %169 = vector.broadcast %168 : vector<1x128xf32> to vector<64x128xf32>
    %170 = arith.addf %167, %169 : vector<64x128xf32>
    %c0_63 = arith.constant 0 : index
    %c0_64 = arith.constant 0 : index
    %171 = vector.load %arg13[%c0_63, %c0_64] : memref<64x128xf32, #tpu.memory_space<vmem>>, vector<64x128xf32>
    tpu.vector_store %arg13[%c0_63, %c0_64], %170 {strides = array<i32>} : memref<64x128xf32, #tpu.memory_space<vmem>>, vector<64x128xf32>,
    %c0_65 = arith.constant 0 : index
    %c0_66 = arith.constant 0 : index
    %172 = vector.load %arg7[%c0_65, %c0_66] : memref<32x128xf32, #tpu.memory_space<vmem>>, vector<32x128xf32>
    %cst_67 = arith.constant 0.000000e+00 : f32
    %173 = vector.broadcast %cst_67 : f32 to vector<8x32xf32>
    %cst_68 = arith.constant 0.000000e+00 : f32
    %174 = vector.broadcast %cst_68 : f32 to vector<8x32xf32>
    %c0_69 = arith.constant 0 : index
    %c0_70 = arith.constant 0 : index
    %175 = vector.load %arg13[%c0_69, %c0_70] : memref<64x128xf32, #tpu.memory_space<vmem>>, vector<8x128xf32>
    %cst_71 = arith.constant dense<0.000000e+00> : vector<8x128xf32>
    %176 = tpu.matmul %173, %172, %cst_71 {dimension_numbers = #tpu.dot_dimension_numbers<[1], [0], [0], [1], [0, 0, 1, 1], [], []>} : vector<8x32xf32>, vector<32x128xf32>, vector<8x128xf32> -> vector<8x128xf32>
    %177 = arith.addf %175, %176 : vector<8x128xf32>
    %178 = arith.negf %177 : vector<8x128xf32>
    %179 = math.exp %178 : vector<8x128xf32>
    %cst_72 = arith.constant 1.000000e+00 : f32
    %180 = vector.broadcast %cst_72 : f32 to vector<8x128xf32>
    %181 = arith.addf %180, %179 : vector<8x128xf32>
    %182 = arith.divf %180, %181 : vector<8x128xf32>
    %183 = vector.extract_strided_slice %182 {offsets = [0, 0], sizes = [8, 32], strides = [1, 1]} : vector<8x128xf32> to vector<8x32xf32>
    %184 = vector.extract_strided_slice %182 {offsets = [0, 32], sizes = [8, 32], strides = [1, 1]} : vector<8x128xf32> to vector<8x32xf32>
    %185 = vector.extract_strided_slice %182 {offsets = [0, 96], sizes = [8, 32], strides = [1, 1]} : vector<8x128xf32> to vector<8x32xf32>
    %186 = vector.extract_strided_slice %177 {offsets = [0, 64], sizes = [8, 32], strides = [1, 1]} : vector<8x128xf32> to vector<8x32xf32>
    %187 = math.tanh %186 : vector<8x32xf32>
    %188 = arith.mulf %184, %174 : vector<8x32xf32>
    %189 = arith.mulf %183, %187 : vector<8x32xf32>
    %190 = arith.addf %188, %189 : vector<8x32xf32>
    %191 = math.tanh %190 : vector<8x32xf32>
    %192 = arith.mulf %185, %191 : vector<8x32xf32>
    %c1_i32 = arith.constant 1 : i32
    %193 = vector.broadcast %c1_i32 : i32 to vector<8x1xi32>
    %194 = arith.cmpi eq, %0, %193 : vector<8x1xi32>
    %195 = vector.shape_cast %194 : vector<8x1xi1> to vector<8x1xi1>
    %196 = vector.broadcast %195 : vector<8x1xi1> to vector<8x32xi1>
    %197 = arith.select %196, %192, %1 : vector<8x32xi1>, vector<8x32xf32>
    %c8_73 = arith.constant 8 : index
    %c0_74 = arith.constant 0 : index
    %198 = vector.load %arg13[%c8_73, %c0_74] : memref<64x128xf32, #tpu.memory_space<vmem>>, vector<8x128xf32>
    %cst_75 = arith.constant dense<0.000000e+00> : vector<8x128xf32>
    %199 = tpu.matmul %192, %172, %cst_75 {dimension_numbers = #tpu.dot_dimension_numbers<[1], [0], [0], [1], [0, 0, 1, 1], [], []>} : vector<8x32xf32>, vector<32x128xf32>, vector<8x128xf32> -> vector<8x128xf32>
    %200 = arith.addf %198, %199 : vector<8x128xf32>
    %201 = arith.negf %200 : vector<8x128xf32>
    %202 = math.exp %201 : vector<8x128xf32>
    %cst_76 = arith.constant 1.000000e+00 : f32
    %203 = vector.broadcast %cst_76 : f32 to vector<8x128xf32>
    %204 = arith.addf %203, %202 : vector<8x128xf32>
    %205 = arith.divf %203, %204 : vector<8x128xf32>
    %206 = vector.extract_strided_slice %205 {offsets = [0, 0], sizes = [8, 32], strides = [1, 1]} : vector<8x128xf32> to vector<8x32xf32>
    %207 = vector.extract_strided_slice %205 {offsets = [0, 32], sizes = [8, 32], strides = [1, 1]} : vector<8x128xf32> to vector<8x32xf32>
    %208 = vector.extract_strided_slice %205 {offsets = [0, 96], sizes = [8, 32], strides = [1, 1]} : vector<8x128xf32> to vector<8x32xf32>
    %209 = vector.extract_strided_slice %200 {offsets = [0, 64], sizes = [8, 32], strides = [1, 1]} : vector<8x128xf32> to vector<8x32xf32>
    %210 = math.tanh %209 : vector<8x32xf32>
    %211 = arith.mulf %207, %190 : vector<8x32xf32>
    %212 = arith.mulf %206, %210 : vector<8x32xf32>
    %213 = arith.addf %211, %212 : vector<8x32xf32>
    %214 = math.tanh %213 : vector<8x32xf32>
    %215 = arith.mulf %208, %214 : vector<8x32xf32>
    %c2_i32 = arith.constant 2 : i32
    %216 = vector.broadcast %c2_i32 : i32 to vector<8x1xi32>
    %217 = arith.cmpi eq, %0, %216 : vector<8x1xi32>
    %218 = vector.shape_cast %217 : vector<8x1xi1> to vector<8x1xi1>
    %219 = vector.broadcast %218 : vector<8x1xi1> to vector<8x32xi1>
    %220 = arith.select %219, %215, %197 : vector<8x32xi1>, vector<8x32xf32>
    %c16_77 = arith.constant 16 : index
    %c0_78 = arith.constant 0 : index
    %221 = vector.load %arg13[%c16_77, %c0_78] : memref<64x128xf32, #tpu.memory_space<vmem>>, vector<8x128xf32>
    %cst_79 = arith.constant dense<0.000000e+00> : vector<8x128xf32>
    %222 = tpu.matmul %215, %172, %cst_79 {dimension_numbers = #tpu.dot_dimension_numbers<[1], [0], [0], [1], [0, 0, 1, 1], [], []>} : vector<8x32xf32>, vector<32x128xf32>, vector<8x128xf32> -> vector<8x128xf32>
    %223 = arith.addf %221, %222 : vector<8x128xf32>
    %224 = arith.negf %223 : vector<8x128xf32>
    %225 = math.exp %224 : vector<8x128xf32>
    %cst_80 = arith.constant 1.000000e+00 : f32
    %226 = vector.broadcast %cst_80 : f32 to vector<8x128xf32>
    %227 = arith.addf %226, %225 : vector<8x128xf32>
    %228 = arith.divf %226, %227 : vector<8x128xf32>
    %229 = vector.extract_strided_slice %228 {offsets = [0, 0], sizes = [8, 32], strides = [1, 1]} : vector<8x128xf32> to vector<8x32xf32>
    %230 = vector.extract_strided_slice %228 {offsets = [0, 32], sizes = [8, 32], strides = [1, 1]} : vector<8x128xf32> to vector<8x32xf32>
    %231 = vector.extract_strided_slice %228 {offsets = [0, 96], sizes = [8, 32], strides = [1, 1]} : vector<8x128xf32> to vector<8x32xf32>
    %232 = vector.extract_strided_slice %223 {offsets = [0, 64], sizes = [8, 32], strides = [1, 1]} : vector<8x128xf32> to vector<8x32xf32>
    %233 = math.tanh %232 : vector<8x32xf32>
    %234 = arith.mulf %230, %213 : vector<8x32xf32>
    %235 = arith.mulf %229, %233 : vector<8x32xf32>
    %236 = arith.addf %234, %235 : vector<8x32xf32>
    %237 = math.tanh %236 : vector<8x32xf32>
    %238 = arith.mulf %231, %237 : vector<8x32xf32>
    %c3_i32 = arith.constant 3 : i32
    %239 = vector.broadcast %c3_i32 : i32 to vector<8x1xi32>
    %240 = arith.cmpi eq, %0, %239 : vector<8x1xi32>
    %241 = vector.shape_cast %240 : vector<8x1xi1> to vector<8x1xi1>
    %242 = vector.broadcast %241 : vector<8x1xi1> to vector<8x32xi1>
    %243 = arith.select %242, %238, %220 : vector<8x32xi1>, vector<8x32xf32>
    %c24_81 = arith.constant 24 : index
    %c0_82 = arith.constant 0 : index
    %244 = vector.load %arg13[%c24_81, %c0_82] : memref<64x128xf32, #tpu.memory_space<vmem>>, vector<8x128xf32>
    %cst_83 = arith.constant dense<0.000000e+00> : vector<8x128xf32>
    %245 = tpu.matmul %238, %172, %cst_83 {dimension_numbers = #tpu.dot_dimension_numbers<[1], [0], [0], [1], [0, 0, 1, 1], [], []>} : vector<8x32xf32>, vector<32x128xf32>, vector<8x128xf32> -> vector<8x128xf32>
    %246 = arith.addf %244, %245 : vector<8x128xf32>
    %247 = arith.negf %246 : vector<8x128xf32>
    %248 = math.exp %247 : vector<8x128xf32>
    %cst_84 = arith.constant 1.000000e+00 : f32
    %249 = vector.broadcast %cst_84 : f32 to vector<8x128xf32>
    %250 = arith.addf %249, %248 : vector<8x128xf32>
    %251 = arith.divf %249, %250 : vector<8x128xf32>
    %252 = vector.extract_strided_slice %251 {offsets = [0, 0], sizes = [8, 32], strides = [1, 1]} : vector<8x128xf32> to vector<8x32xf32>
    %253 = vector.extract_strided_slice %251 {offsets = [0, 32], sizes = [8, 32], strides = [1, 1]} : vector<8x128xf32> to vector<8x32xf32>
    %254 = vector.extract_strided_slice %251 {offsets = [0, 96], sizes = [8, 32], strides = [1, 1]} : vector<8x128xf32> to vector<8x32xf32>
    %255 = vector.extract_strided_slice %246 {offsets = [0, 64], sizes = [8, 32], strides = [1, 1]} : vector<8x128xf32> to vector<8x32xf32>
    %256 = math.tanh %255 : vector<8x32xf32>
    %257 = arith.mulf %253, %236 : vector<8x32xf32>
    %258 = arith.mulf %252, %256 : vector<8x32xf32>
    %259 = arith.addf %257, %258 : vector<8x32xf32>
    %260 = math.tanh %259 : vector<8x32xf32>
    %261 = arith.mulf %254, %260 : vector<8x32xf32>
    %c4_i32 = arith.constant 4 : i32
    %262 = vector.broadcast %c4_i32 : i32 to vector<8x1xi32>
    %263 = arith.cmpi eq, %0, %262 : vector<8x1xi32>
    %264 = vector.shape_cast %263 : vector<8x1xi1> to vector<8x1xi1>
    %265 = vector.broadcast %264 : vector<8x1xi1> to vector<8x32xi1>
    %266 = arith.select %265, %261, %243 : vector<8x32xi1>, vector<8x32xf32>
    %c32_85 = arith.constant 32 : index
    %c0_86 = arith.constant 0 : index
    %267 = vector.load %arg13[%c32_85, %c0_86] : memref<64x128xf32, #tpu.memory_space<vmem>>, vector<8x128xf32>
    %cst_87 = arith.constant dense<0.000000e+00> : vector<8x128xf32>
    %268 = tpu.matmul %261, %172, %cst_87 {dimension_numbers = #tpu.dot_dimension_numbers<[1], [0], [0], [1], [0, 0, 1, 1], [], []>} : vector<8x32xf32>, vector<32x128xf32>, vector<8x128xf32> -> vector<8x128xf32>
    %269 = arith.addf %267, %268 : vector<8x128xf32>
    %270 = arith.negf %269 : vector<8x128xf32>
    %271 = math.exp %270 : vector<8x128xf32>
    %cst_88 = arith.constant 1.000000e+00 : f32
    %272 = vector.broadcast %cst_88 : f32 to vector<8x128xf32>
    %273 = arith.addf %272, %271 : vector<8x128xf32>
    %274 = arith.divf %272, %273 : vector<8x128xf32>
    %275 = vector.extract_strided_slice %274 {offsets = [0, 0], sizes = [8, 32], strides = [1, 1]} : vector<8x128xf32> to vector<8x32xf32>
    %276 = vector.extract_strided_slice %274 {offsets = [0, 32], sizes = [8, 32], strides = [1, 1]} : vector<8x128xf32> to vector<8x32xf32>
    %277 = vector.extract_strided_slice %274 {offsets = [0, 96], sizes = [8, 32], strides = [1, 1]} : vector<8x128xf32> to vector<8x32xf32>
    %278 = vector.extract_strided_slice %269 {offsets = [0, 64], sizes = [8, 32], strides = [1, 1]} : vector<8x128xf32> to vector<8x32xf32>
    %279 = math.tanh %278 : vector<8x32xf32>
    %280 = arith.mulf %276, %259 : vector<8x32xf32>
    %281 = arith.mulf %275, %279 : vector<8x32xf32>
    %282 = arith.addf %280, %281 : vector<8x32xf32>
    %283 = math.tanh %282 : vector<8x32xf32>
    %284 = arith.mulf %277, %283 : vector<8x32xf32>
    %c5_i32 = arith.constant 5 : i32
    %285 = vector.broadcast %c5_i32 : i32 to vector<8x1xi32>
    %286 = arith.cmpi eq, %0, %285 : vector<8x1xi32>
    %287 = vector.shape_cast %286 : vector<8x1xi1> to vector<8x1xi1>
    %288 = vector.broadcast %287 : vector<8x1xi1> to vector<8x32xi1>
    %289 = arith.select %288, %284, %266 : vector<8x32xi1>, vector<8x32xf32>
    %c40_89 = arith.constant 40 : index
    %c0_90 = arith.constant 0 : index
    %290 = vector.load %arg13[%c40_89, %c0_90] : memref<64x128xf32, #tpu.memory_space<vmem>>, vector<8x128xf32>
    %cst_91 = arith.constant dense<0.000000e+00> : vector<8x128xf32>
    %291 = tpu.matmul %284, %172, %cst_91 {dimension_numbers = #tpu.dot_dimension_numbers<[1], [0], [0], [1], [0, 0, 1, 1], [], []>} : vector<8x32xf32>, vector<32x128xf32>, vector<8x128xf32> -> vector<8x128xf32>
    %292 = arith.addf %290, %291 : vector<8x128xf32>
    %293 = arith.negf %292 : vector<8x128xf32>
    %294 = math.exp %293 : vector<8x128xf32>
    %cst_92 = arith.constant 1.000000e+00 : f32
    %295 = vector.broadcast %cst_92 : f32 to vector<8x128xf32>
    %296 = arith.addf %295, %294 : vector<8x128xf32>
    %297 = arith.divf %295, %296 : vector<8x128xf32>
    %298 = vector.extract_strided_slice %297 {offsets = [0, 0], sizes = [8, 32], strides = [1, 1]} : vector<8x128xf32> to vector<8x32xf32>
    %299 = vector.extract_strided_slice %297 {offsets = [0, 32], sizes = [8, 32], strides = [1, 1]} : vector<8x128xf32> to vector<8x32xf32>
    %300 = vector.extract_strided_slice %297 {offsets = [0, 96], sizes = [8, 32], strides = [1, 1]} : vector<8x128xf32> to vector<8x32xf32>
    %301 = vector.extract_strided_slice %292 {offsets = [0, 64], sizes = [8, 32], strides = [1, 1]} : vector<8x128xf32> to vector<8x32xf32>
    %302 = math.tanh %301 : vector<8x32xf32>
    %303 = arith.mulf %299, %282 : vector<8x32xf32>
    %304 = arith.mulf %298, %302 : vector<8x32xf32>
    %305 = arith.addf %303, %304 : vector<8x32xf32>
    %306 = math.tanh %305 : vector<8x32xf32>
    %307 = arith.mulf %300, %306 : vector<8x32xf32>
    %c6_i32 = arith.constant 6 : i32
    %308 = vector.broadcast %c6_i32 : i32 to vector<8x1xi32>
    %309 = arith.cmpi eq, %0, %308 : vector<8x1xi32>
    %310 = vector.shape_cast %309 : vector<8x1xi1> to vector<8x1xi1>
    %311 = vector.broadcast %310 : vector<8x1xi1> to vector<8x32xi1>
    %312 = arith.select %311, %307, %289 : vector<8x32xi1>, vector<8x32xf32>
    %c48_93 = arith.constant 48 : index
    %c0_94 = arith.constant 0 : index
    %313 = vector.load %arg13[%c48_93, %c0_94] : memref<64x128xf32, #tpu.memory_space<vmem>>, vector<8x128xf32>
    %cst_95 = arith.constant dense<0.000000e+00> : vector<8x128xf32>
    %314 = tpu.matmul %307, %172, %cst_95 {dimension_numbers = #tpu.dot_dimension_numbers<[1], [0], [0], [1], [0, 0, 1, 1], [], []>} : vector<8x32xf32>, vector<32x128xf32>, vector<8x128xf32> -> vector<8x128xf32>
    %315 = arith.addf %313, %314 : vector<8x128xf32>
    %316 = arith.negf %315 : vector<8x128xf32>
    %317 = math.exp %316 : vector<8x128xf32>
    %cst_96 = arith.constant 1.000000e+00 : f32
    %318 = vector.broadcast %cst_96 : f32 to vector<8x128xf32>
    %319 = arith.addf %318, %317 : vector<8x128xf32>
    %320 = arith.divf %318, %319 : vector<8x128xf32>
    %321 = vector.extract_strided_slice %320 {offsets = [0, 0], sizes = [8, 32], strides = [1, 1]} : vector<8x128xf32> to vector<8x32xf32>
    %322 = vector.extract_strided_slice %320 {offsets = [0, 32], sizes = [8, 32], strides = [1, 1]} : vector<8x128xf32> to vector<8x32xf32>
    %323 = vector.extract_strided_slice %320 {offsets = [0, 96], sizes = [8, 32], strides = [1, 1]} : vector<8x128xf32> to vector<8x32xf32>
    %324 = vector.extract_strided_slice %315 {offsets = [0, 64], sizes = [8, 32], strides = [1, 1]} : vector<8x128xf32> to vector<8x32xf32>
    %325 = math.tanh %324 : vector<8x32xf32>
    %326 = arith.mulf %322, %305 : vector<8x32xf32>
    %327 = arith.mulf %321, %325 : vector<8x32xf32>
    %328 = arith.addf %326, %327 : vector<8x32xf32>
    %329 = math.tanh %328 : vector<8x32xf32>
    %330 = arith.mulf %323, %329 : vector<8x32xf32>
    %c7_i32 = arith.constant 7 : i32
    %331 = vector.broadcast %c7_i32 : i32 to vector<8x1xi32>
    %332 = arith.cmpi eq, %0, %331 : vector<8x1xi32>
    %333 = vector.shape_cast %332 : vector<8x1xi1> to vector<8x1xi1>
    %334 = vector.broadcast %333 : vector<8x1xi1> to vector<8x32xi1>
    %335 = arith.select %334, %330, %312 : vector<8x32xi1>, vector<8x32xf32>
    %c56_97 = arith.constant 56 : index
    %c0_98 = arith.constant 0 : index
    %336 = vector.load %arg13[%c56_97, %c0_98] : memref<64x128xf32, #tpu.memory_space<vmem>>, vector<8x128xf32>
    %cst_99 = arith.constant dense<0.000000e+00> : vector<8x128xf32>
    %337 = tpu.matmul %330, %172, %cst_99 {dimension_numbers = #tpu.dot_dimension_numbers<[1], [0], [0], [1], [0, 0, 1, 1], [], []>} : vector<8x32xf32>, vector<32x128xf32>, vector<8x128xf32> -> vector<8x128xf32>
    %338 = arith.addf %336, %337 : vector<8x128xf32>
    %339 = arith.negf %338 : vector<8x128xf32>
    %340 = math.exp %339 : vector<8x128xf32>
    %cst_100 = arith.constant 1.000000e+00 : f32
    %341 = vector.broadcast %cst_100 : f32 to vector<8x128xf32>
    %342 = arith.addf %341, %340 : vector<8x128xf32>
    %343 = arith.divf %341, %342 : vector<8x128xf32>
    %344 = vector.extract_strided_slice %343 {offsets = [0, 0], sizes = [8, 32], strides = [1, 1]} : vector<8x128xf32> to vector<8x32xf32>
    %345 = vector.extract_strided_slice %343 {offsets = [0, 32], sizes = [8, 32], strides = [1, 1]} : vector<8x128xf32> to vector<8x32xf32>
    %346 = vector.extract_strided_slice %343 {offsets = [0, 96], sizes = [8, 32], strides = [1, 1]} : vector<8x128xf32> to vector<8x32xf32>
    %347 = vector.extract_strided_slice %338 {offsets = [0, 64], sizes = [8, 32], strides = [1, 1]} : vector<8x128xf32> to vector<8x32xf32>
    %348 = math.tanh %347 : vector<8x32xf32>
    %349 = arith.mulf %345, %328 : vector<8x32xf32>
    %350 = arith.mulf %344, %348 : vector<8x32xf32>
    %351 = arith.addf %349, %350 : vector<8x32xf32>
    %352 = math.tanh %351 : vector<8x32xf32>
    %353 = arith.mulf %346, %352 : vector<8x32xf32>
    %c8_i32 = arith.constant 8 : i32
    %354 = vector.broadcast %c8_i32 : i32 to vector<8x1xi32>
    %355 = arith.cmpi eq, %0, %354 : vector<8x1xi32>
    %356 = vector.shape_cast %355 : vector<8x1xi1> to vector<8x1xi1>
    %357 = vector.broadcast %356 : vector<8x1xi1> to vector<8x32xi1>
    %358 = arith.select %357, %353, %335 : vector<8x32xi1>, vector<8x32xf32>
    %c0_101 = arith.constant 0 : index
    %c0_102 = arith.constant 0 : index
    %359 = vector.load %arg9[%c0_101, %c0_102] : memref<32x1xf32, #tpu.memory_space<vmem>>, vector<32x1xf32>
    %cst_103 = arith.constant dense<0.000000e+00> : vector<8x1xf32>
    %360 = tpu.matmul %358, %359, %cst_103 {dimension_numbers = #tpu.dot_dimension_numbers<[1], [0], [0], [1], [0, 0, 1, 1], [], []>} : vector<8x32xf32>, vector<32x1xf32>, vector<8x1xf32> -> vector<8x1xf32>
    %c0_104 = arith.constant 0 : index
    %c0_105 = arith.constant 0 : index
    %361 = vector.load %arg10[%c0_104, %c0_105] : memref<1x1xf32, #tpu.memory_space<vmem>>, vector<1x1xf32>
    %362 = vector.broadcast %361 : vector<1x1xf32> to vector<8x1xf32>
    %363 = arith.addf %360, %362 : vector<8x1xf32>
    %c0_106 = arith.constant 0 : index
    %c0_107 = arith.constant 0 : index
    %364 = vector.load %arg11[%c0_106, %c0_107] : memref<8x1xf32, #tpu.memory_space<vmem>>, vector<8x1xf32>
    tpu.vector_store %arg11[%c0_106, %c0_107], %363 {strides = array<i32>} : memref<8x1xf32, #tpu.memory_space<vmem>>, vector<8x1xf32>,
    return
  }
  func.func @transform_0(%arg0: i32) -> (i32, i32, i32) {
    %c0_i32 = arith.constant 0 : i32
    %c0_i32_0 = arith.constant 0 : i32
    %c0_i32_1 = arith.constant 0 : i32
    return %c0_i32, %arg0, %c0_i32_0 : i32, i32, i32
  }
  func.func @transform_1(%arg0: i32) -> (i32, i32) {
    %c0_i32 = arith.constant 0 : i32
    %c0_i32_0 = arith.constant 0 : i32
    return %arg0, %c0_i32 : i32, i32
  }
  func.func @transform_2(%arg0: i32) -> (i32, i32) {
    %c0_i32 = arith.constant 0 : i32
    %c0_i32_0 = arith.constant 0 : i32
    %c0_i32_1 = arith.constant 0 : i32
    return %c0_i32, %c0_i32_0 : i32, i32
  }
  func.func @transform_3(%arg0: i32) -> (i32, i32) {
    %c0_i32 = arith.constant 0 : i32
    %c0_i32_0 = arith.constant 0 : i32
    %c0_i32_1 = arith.constant 0 : i32
    return %c0_i32, %c0_i32_0 : i32, i32
  }
  func.func @transform_4(%arg0: i32) -> (i32, i32) {
    %c0_i32 = arith.constant 0 : i32
    %c0_i32_0 = arith.constant 0 : i32
    %c0_i32_1 = arith.constant 0 : i32
    return %c0_i32, %c0_i32_0 : i32, i32
  }
  func.func @transform_5(%arg0: i32) -> (i32, i32) {
    %c0_i32 = arith.constant 0 : i32
    %c0_i32_0 = arith.constant 0 : i32
    %c0_i32_1 = arith.constant 0 : i32
    return %c0_i32, %c0_i32_0 : i32, i32
  }
  func.func @transform_6(%arg0: i32) -> (i32, i32) {
    %c0_i32 = arith.constant 0 : i32
    %c0_i32_0 = arith.constant 0 : i32
    %c0_i32_1 = arith.constant 0 : i32
    return %c0_i32, %c0_i32_0 : i32, i32
  }
  func.func @transform_7(%arg0: i32) -> (i32, i32) {
    %c0_i32 = arith.constant 0 : i32
    %c0_i32_0 = arith.constant 0 : i32
    %c0_i32_1 = arith.constant 0 : i32
    return %c0_i32, %c0_i32_0 : i32, i32
  }
  func.func @transform_8(%arg0: i32) -> (i32, i32) {
    %c0_i32 = arith.constant 0 : i32
    %c0_i32_0 = arith.constant 0 : i32
    %c0_i32_1 = arith.constant 0 : i32
    return %c0_i32, %c0_i32_0 : i32, i32
  }
  func.func @transform_9(%arg0: i32) -> (i32, i32) {
    %c0_i32 = arith.constant 0 : i32
    %c0_i32_0 = arith.constant 0 : i32
    %c0_i32_1 = arith.constant 0 : i32
    return %c0_i32, %c0_i32_0 : i32, i32
  }
  func.func @transform_10(%arg0: i32) -> (i32, i32) {
    %c0_i32 = arith.constant 0 : i32
    %c0_i32_0 = arith.constant 0 : i32
    return %arg0, %c0_i32 : i32, i32
  }
}

</mosaic_0001>

<llo_original>
// kernel: tpu_custom_call.1
$region0: #{tpu_custom_call.1}
  #allocation0 [shape = 'u32[]', space=smem, size = 0x4, offset = 0x4, fixed_abs, tag = 'smem constant byte address 0x4 - core index']
  #allocation1 [shape = 'u32[72,128]{1,0:T(1,128)}', space=vmem, size = 0x9000, scoped, tag = 'internal scratch']
  #allocation2 [shape = 'f32[64,32]{1,0:T(8,128)}', space=vmem, size = 0x8000, scoped, tag = 'scratch operand']
  #allocation3 [shape = 'f32[64,128]{1,0:T(8,128)}', space=vmem, size = 0x8000, scoped, tag = 'scratch operand']
  #allocation4 [shape = 'f32[1,1]{1,0:T(1,128)S(1)}', space=vmem, size = 0x200, scoped, tag = 'scoped memory for tpu_custom_call.1']
  %s0 = inlined_call_operand.hbm [shape: f32[8,8,16], index: 0, kind: input, shape index: {}]
  %s1 = inlined_call_operand.vmem [shape: s32[8,1], index: 1, kind: input, shape index: {}]
  %s2 = inlined_call_operand.hbm [shape: f32[16,128], index: 2, kind: input, shape index: {}]
  %s3 = inlined_call_operand.vmem [shape: f32[32,128], index: 3, kind: input, shape index: {}]
  %s4 = inlined_call_operand.vmem [shape: f32[1,128], index: 4, kind: input, shape index: {}]
  %s5 = inlined_call_operand.hbm [shape: f32[32,128], index: 5, kind: input, shape index: {}]
  %s6 = inlined_call_operand.hbm [shape: f32[32,128], index: 6, kind: input, shape index: {}]
  %s7 = inlined_call_operand.vmem [shape: f32[1,128], index: 7, kind: input, shape index: {}]
  %s8 = inlined_call_operand.vmem [shape: f32[32,1], index: 8, kind: input, shape index: {}]
  %s9 = inlined_call_operand.<no memory space> [shape: f32[1,1], index: 9, kind: input, shape index: {}]
  %s10 = inlined_call_operand.vmem [shape: f32[8,1], index: 10, kind: output, shape index: {}]
  %s11 = sld [smem:[#allocation0]]
  $region66: #{tpu_custom_call.1} parent=0
    _
  %s13 = ssub.s32 1, %s11
  %s14 = scalar_select 0, %s13, %s11
  %v15 = vstv %s9
  %16 = vst [vmem:[#allocation4] sm:$0x1] %v15
  $region1: #{tpu_custom_call.1} parent=0
    #allocation5 [shape = 'u8[32768]{0}', space=vmem, size = 0x8000, scoped, tag = 'input window, operand 0, single buffered']
    #allocation6 [shape = 's32[1]{0}', space=sflag, size = 0x4, scoped, tag = 'scoped memory for tpu_custom_call.1']
    #allocation7 [shape = 'u8[8192]{0}', space=vmem, size = 0x2000, scoped, tag = 'input window, operand 2, single buffered']
    #allocation8 [shape = 's32[1]{0}', space=sflag, size = 0x4, scoped, tag = 'scoped memory for tpu_custom_call.1']
    #allocation9 [shape = 'u8[16384]{0}', space=vmem, size = 0x4000, scoped, tag = 'input window, operand 5, single buffered']
    #allocation10 [shape = 'u8[16384]{0}', space=vmem, size = 0x4000, scoped, tag = 'input window, operand 6, single buffered']
    #allocation11 [shape = 's32[1]{0}', space=sflag, size = 0x4, scoped, tag = 'scoped memory for tpu_custom_call.1']
    %17 = vsyncpa [#allocation6], 0
    %18 = vsyncpa [#allocation8], 0
    %19 = vsyncpa [#allocation11], 0
    // Predicated region
    $region2: #{tpu_custom_call.1} parent=1 // pred_check
      _
    $region3: #{tpu_custom_call.1} parent=1 // pred_check_branch
      %21 = sbr.rel (0) target = $region5
    $region4: #{tpu_custom_call.1} parent=1 // pred_region
      %23 = vsyncadd [#allocation6], 0
      %s24 = sshll.u32 %s0, 4
      %s25 = int_to_ptr.hbm [resolvable:$true] %s24
      %s26 = sshll.u32 [#allocation5], 4
      %s27 = int_to_ptr.vmem [resolvable:$true] %s26
      %32 = dma.hbm_to_vmem [thread:$0]  %s25, 1024, %s27, [#allocation6], 128, 128, 8
    $region5: #{tpu_custom_call.1} parent=1 // pred_fallthru
      _
    // Predicated region
    $region6: #{tpu_custom_call.1} parent=1 // pred_check
      _
    $region7: #{tpu_custom_call.1} parent=1 // pred_check_branch
      %34 = sbr.rel (0) target = $region9
    $region8: #{tpu_custom_call.1} parent=1 // pred_region
      _
    $region9: #{tpu_custom_call.1} parent=1 // pred_fallthru
      _
    // Predicated region
    $region10: #{tpu_custom_call.1} parent=1 // pred_check
      _
    $region11: #{tpu_custom_call.1} parent=1 // pred_check_branch
      %36 = sbr.rel (0) target = $region13
    $region12: #{tpu_custom_call.1} parent=1 // pred_region
      %38 = vsyncadd [#allocation8], 0
      %s39 = sshll.u32 %s2, 4
      %s40 = int_to_ptr.hbm [resolvable:$true] %s39
      %s41 = sshll.u32 [#allocation7], 4
      %s42 = int_to_ptr.vmem [resolvable:$true] %s41
      %47 = dma.hbm_to_vmem [thread:$0]  %s40, 256, %s42, [#allocation8], 128, 128, 8
    $region13: #{tpu_custom_call.1} parent=1 // pred_fallthru
      _
    // Predicated region
    $region14: #{tpu_custom_call.1} parent=1 // pred_check
      _
    $region15: #{tpu_custom_call.1} parent=1 // pred_check_branch
      %49 = sbr.rel (0) target = $region17
    $region16: #{tpu_custom_call.1} parent=1 // pred_region
      _
    $region17: #{tpu_custom_call.1} parent=1 // pred_fallthru
      _
    // Predicated region
    $region18: #{tpu_custom_call.1} parent=1 // pred_check
      _
    $region19: #{tpu_custom_call.1} parent=1 // pred_check_branch
      %51 = sbr.rel (0) target = $region21
    $region20: #{tpu_custom_call.1} parent=1 // pred_region
      _
    $region21: #{tpu_custom_call.1} parent=1 // pred_fallthru
      _
    // Predicated region
    $region22: #{tpu_custom_call.1} parent=1 // pred_check
      _
    $region23: #{tpu_custom_call.1} parent=1 // pred_check_branch
      %53 = sbr.rel (0) target = $region25
    $region24: #{tpu_custom_call.1} parent=1 // pred_region
      %55 = vsyncadd [#allocation8], 0
      %s56 = sshll.u32 %s5, 4
      %s57 = int_to_ptr.hbm [resolvable:$true] %s56
      %s58 = sshll.u32 [#allocation9], 4
      %s59 = int_to_ptr.vmem [resolvable:$true] %s58
      %64 = dma.hbm_to_vmem [thread:$0]  %s57, 512, %s59, [#allocation8], 128, 128, 8
    $region25: #{tpu_custom_call.1} parent=1 // pred_fallthru
      _
    // Predicated region
    $region26: #{tpu_custom_call.1} parent=1 // pred_check
      _
    $region27: #{tpu_custom_call.1} parent=1 // pred_check_branch
      %66 = sbr.rel (0) target = $region29
    $region28: #{tpu_custom_call.1} parent=1 // pred_region
      %68 = vsyncadd [#allocation11], 0
      %s69 = sshll.u32 %s6, 4
      %s70 = int_to_ptr.hbm [resolvable:$true] %s69
      %s71 = sshll.u32 [#allocation10], 4
      %s72 = int_to_ptr.vmem [resolvable:$true] %s71
      %77 = dma.hbm_to_vmem [thread:$0]  %s70, 512, %s72, [#allocation11], 128, 128, 8
    $region29: #{tpu_custom_call.1} parent=1 // pred_fallthru
      _
    // Predicated region
    $region30: #{tpu_custom_call.1} parent=1 // pred_check
      _
    $region31: #{tpu_custom_call.1} parent=1 // pred_check_branch
      %79 = sbr.rel (0) target = $region33
    $region32: #{tpu_custom_call.1} parent=1 // pred_region
      _
    $region33: #{tpu_custom_call.1} parent=1 // pred_fallthru
      _
    // Predicated region
    $region34: #{tpu_custom_call.1} parent=1 // pred_check
      _
    $region35: #{tpu_custom_call.1} parent=1 // pred_check_branch
      %81 = sbr.rel (0) target = $region37
    $region36: #{tpu_custom_call.1} parent=1 // pred_region
      _
    $region37: #{tpu_custom_call.1} parent=1 // pred_fallthru
      _
    // Predicated region
    $region38: #{tpu_custom_call.1} parent=1 // pred_check
      _
    $region39: #{tpu_custom_call.1} parent=1 // pred_check_branch
      %83 = sbr.rel (0) target = $region41
    $region40: #{tpu_custom_call.1} parent=1 // pred_region
      _
    $region41: #{tpu_custom_call.1} parent=1 // pred_fallthru
      _
    // Predicated region
    $region42: #{tpu_custom_call.1} parent=1 // pred_check
      _
    $region43: #{tpu_custom_call.1} parent=1 // pred_check_branch
      %85 = sbr.rel (0) target = $region45
    $region44: #{tpu_custom_call.1} parent=1 // pred_region
      %87 = dma.done [#allocation6], 1024
    $region45: #{tpu_custom_call.1} parent=1 // pred_fallthru
      _
    // Predicated region
    $region46: #{tpu_custom_call.1} parent=1 // pred_check
      _
    $region47: #{tpu_custom_call.1} parent=1 // pred_check_branch
      %89 = sbr.rel (0) target = $region49
    $region48: #{tpu_custom_call.1} parent=1 // pred_region
      %91 = dma.done [#allocation8], 256
    $region49: #{tpu_custom_call.1} parent=1 // pred_fallthru
      _
    // Predicated region
    $region50: #{tpu_custom_call.1} parent=1 // pred_check
      _
    $region51: #{tpu_custom_call.1} parent=1 // pred_check_branch
      %93 = sbr.rel (0) target = $region53
    $region52: #{tpu_custom_call.1} parent=1 // pred_region
      %95 = dma.done [#allocation8], 512
    $region53: #{tpu_custom_call.1} parent=1 // pred_fallthru
      _
    // Predicated region
    $region54: #{tpu_custom_call.1} parent=1 // pred_check
      _
    $region55: #{tpu_custom_call.1} parent=1 // pred_check_branch
      %97 = sbr.rel (0) target = $region57
    $region56: #{tpu_custom_call.1} parent=1 // pred_region
      %99 = dma.done [#allocation11], 512
    $region57: #{tpu_custom_call.1} parent=1 // pred_fallthru
      _
    %v100 = vld [vmem:[%s1] sm:$0xff]
    %v101 = vld [vmem:[#allocation5] sm:$0xff]
    %v102 = vld [vmem:[#allocation5 + $0x8] sm:$0xff]
    %v103 = vld [vmem:[#allocation5 + $0x10] sm:$0xff]
    %v104 = vld [vmem:[#allocation5 + $0x18] sm:$0xff]
    %v105 = vld [vmem:[#allocation5 + $0x20] sm:$0xff]
    %v106 = vld [vmem:[#allocation5 + $0x28] sm:$0xff]
    %v107 = vld [vmem:[#allocation5 + $0x30] sm:$0xff]
    %v108 = vld [vmem:[#allocation5 + $0x38] sm:$0xff]
    %v109 = vld [vmem:[#allocation7] sm:$0xff]
    %v110 = vld [vmem:[#allocation7 + $0x8] sm:$0xff]
    %v111 = vld [vmem:[%s4] sm:$0x1]
    %v113 = vperm.slane %v111, 0
    %vm115 = vcmask 130048
    %v117 = vsel %vm115, %v101, 0
    %v120 = vsel %vm115, %v102, 0
    %v123 = vsel %vm115, %v103, 0
    %v126 = vsel %vm115, %v104, 0
    %v129 = vsel %vm115, %v105, 0
    %v132 = vsel %vm115, %v106, 0
    %v135 = vsel %vm115, %v107, 0
    %v138 = vsel %vm115, %v108, 0
    %140 = vmatpush.msra.mxu0 0.0
    %141 = vmatpush.msra.mxu0 0.0
    %142 = vmatpush.msra.mxu0 0.0
    %143 = vmatpush.msra.mxu0 0.0
    %144 = vmatpush.msra.mxu0 0.0
    %145 = vmatpush.msra.mxu0 0.0
    %146 = vmatpush.msra.mxu0 0.0
    %147 = vmatpush.msra.mxu0 0.0
    %148 = vmatpush.msra.mxu0 0.0
    %149 = vmatpush.msra.mxu0 0.0
    %150 = vmatpush.msra.mxu0 0.0
    %151 = vmatpush.msra.mxu0 0.0
    %152 = vmatpush.msra.mxu0 0.0
    %153 = vmatpush.msra.mxu0 0.0
    %154 = vmatpush.msra.mxu0 %v110
    %155 = vmatpush.msra.mxu0 %v109
    %156 = vmatmul.f32.gmra.mxu0 %v117
    %v157 = vpop.f32.mrf.mxu0
    %v158 = vadd.f32 %v113, %v157
    %159 = vmatmul.f32.gmra.mxu0 %v120
    %v160 = vpop.f32.mrf.mxu0
    %v161 = vadd.f32 %v113, %v160
    %162 = vmatmul.f32.gmra.mxu0 %v123
    %v163 = vpop.f32.mrf.mxu0
    %v164 = vadd.f32 %v113, %v163
    %165 = vmatmul.f32.gmra.mxu0 %v126
    %v166 = vpop.f32.mrf.mxu0
    %v167 = vadd.f32 %v113, %v166
    %168 = vmatmul.f32.gmra.mxu0 %v129
    %v169 = vpop.f32.mrf.mxu0
    %v170 = vadd.f32 %v113, %v169
    %171 = vmatmul.f32.gmra.mxu0 %v132
    %v172 = vpop.f32.mrf.mxu0
    %v173 = vadd.f32 %v113, %v172
    %174 = vmatmul.f32.gmra.mxu0 %v135
    %v175 = vpop.f32.mrf.mxu0
    %v176 = vadd.f32 %v113, %v175
    %177 = vmatmul.f32.gmra.mxu0 %v138
    %v178 = vpop.f32.mrf.mxu0
    %v179 = vadd.f32 %v113, %v178
    %180 = vdwg.mxu0
    %181 = vst [vmem:[#allocation3] sm:$0xff] %v158
    %182 = vst [vmem:[#allocation3 + $0x8] sm:$0xff] %v161
    %183 = vst [vmem:[#allocation3 + $0x10] sm:$0xff] %v164
    %184 = vst [vmem:[#allocation3 + $0x18] sm:$0xff] %v167
    %185 = vst [vmem:[#allocation3 + $0x20] sm:$0xff] %v170
    %186 = vst [vmem:[#allocation3 + $0x28] sm:$0xff] %v173
    %187 = vst [vmem:[#allocation3 + $0x30] sm:$0xff] %v176
    %188 = vst [vmem:[#allocation3 + $0x38] sm:$0xff] %v179
    %v189 = vld [vmem:[%s3] sm:$0xff]
    %v190 = vld [vmem:[%s3 + $0x8] sm:$0xff]
    %v191 = vld [vmem:[%s3 + $0x10] sm:$0xff]
    %v192 = vld [vmem:[%s3 + $0x18] sm:$0xff]
    %v193 = vld [vmem:[#allocation3] sm:$0xff]
    %vm194 = vcmask 261120
    %v196 = vsel %vm194, 0.0, 0
    %198 = vmatpush.msra.mxu0 0.0
    %199 = vmatpush.msra.mxu0 0.0
    %200 = vmatpush.msra.mxu0 0.0
    %201 = vmatpush.msra.mxu0 0.0
    %202 = vmatpush.msra.mxu0 0.0
    %203 = vmatpush.msra.mxu0 0.0
    %204 = vmatpush.msra.mxu0 0.0
    %205 = vmatpush.msra.mxu0 0.0
    %206 = vmatpush.msra.mxu0 0.0
    %207 = vmatpush.msra.mxu0 0.0
    %208 = vmatpush.msra.mxu0 0.0
    %209 = vmatpush.msra.mxu0 0.0
    %210 = vmatpush.msra.mxu0 %v192
    %211 = vmatpush.msra.mxu0 %v191
    %212 = vmatpush.msra.mxu0 %v190
    %213 = vmatpush.msra.mxu0 %v189
    %214 = vmatmul.f32.gmra.mxu0 %v196
    %v215 = vpop.f32.mrf.mxu0
    %v216 = vadd.f32 0.0, %v215
    %217 = vdwg.mxu0
    %v218 = vadd.f32 %v193, %v216
    %v219 = vxor.u32 %v218, 2147483648
    %v220 = vmul.f32 %v219, 1.442695
    %v221 = vpow.pop %v220
    %v222 = vadd.f32 %v221, 1.0
    %v223 = vrcp.pop %v222
    %v224 = vmul.f32 %v222, %v223
    %v225 = vsub.f32 1.0, %v224
    %v226 = vmul.f32 %v223, %v225
    %v227 = vadd.f32 %v223, %v226
    %vm228 = vweird.f32 %v222
    %vm229 = vweird.f32 %v223
    %vm230 = vmor %vm228, %vm229
    %v231 = vsel %vm230, %v223, %v227
    %v232 = vand.u32 2147483647, %v222
    %vm233 = vcmp.eq.f32.partialorder %v232, 8.507059e+37
    %v234 = vand.u32 %v222, 2147483648
    %v235 = vor.u32 1.1754944e-38, %v234
    %v236 = vsel %vm233, %v235, %v231
    %v237 = vmul.f32 1.0, %v236
    %v238 = vtanh.pop %v218
    %v239 = vmul.f32 %v237, 0.0
    %241 = vrot.lane.b32.xlu0 %v238, 64
    %v242 = vpop.permute.xlu0 %241
    %v244 = vmul.f32 %v237, %v242
    %246 = vrot.lane.b32.xlu0 %v244, 32
    %v247 = vpop.permute.xlu0 %246
    %v249 = vadd.f32 %v239, %v247
    %v250 = vtanh.pop %v249
    %252 = vrot.lane.b32.xlu0 %v250, 64
    %v253 = vpop.permute.xlu0 %252
    %v255 = vmul.f32 %v237, %v253
    %257 = vrot.lane.b32.xlu0 %v255, 32
    %v258 = vpop.permute.xlu0 %257
    %260 = vst.msk [vmem:[#allocation2] sm:$0xff] %vm194, %v258
    %v261 = vld [vmem:[#allocation3 + $0x8] sm:$0xff]
    %v262 = vsel %vm194, %v258, 0
    %264 = vmatpush.msra.mxu0 0.0
    %265 = vmatpush.msra.mxu0 0.0
    %266 = vmatpush.msra.mxu0 0.0
    %267 = vmatpush.msra.mxu0 0.0
    %268 = vmatpush.msra.mxu0 0.0
    %269 = vmatpush.msra.mxu0 0.0
    %270 = vmatpush.msra.mxu0 0.0
    %271 = vmatpush.msra.mxu0 0.0
    %272 = vmatpush.msra.mxu0 0.0
    %273 = vmatpush.msra.mxu0 0.0
    %274 = vmatpush.msra.mxu0 0.0
    %275 = vmatpush.msra.mxu0 0.0
    %276 = vmatpush.msra.mxu0 %v192
    %277 = vmatpush.msra.mxu0 %v191
    %278 = vmatpush.msra.mxu0 %v190
    %279 = vmatpush.msra.mxu0 %v189
    %280 = vmatmul.f32.gmra.mxu0 %v262
    %v281 = vpop.f32.mrf.mxu0
    %v282 = vadd.f32 0.0, %v281
    %283 = vdwg.mxu0
    %v284 = vadd.f32 %v261, %v282
    %v285 = vxor.u32 %v284, 2147483648
    %v286 = vmul.f32 %v285, 1.442695
    %v287 = vpow.pop %v286
    %v288 = vadd.f32 %v287, 1.0
    %v289 = vrcp.pop %v288
    %v290 = vmul.f32 %v288, %v289
    %v291 = vsub.f32 1.0, %v290
    %v292 = vmul.f32 %v289, %v291
    %v293 = vadd.f32 %v289, %v292
    %vm294 = vweird.f32 %v288
    %vm295 = vweird.f32 %v289
    %vm296 = vmor %vm294, %vm295
    %v297 = vsel %vm296, %v289, %v293
    %v298 = vand.u32 2147483647, %v288
    %vm299 = vcmp.eq.f32.partialorder %v298, 8.507059e+37
    %v300 = vand.u32 %v288, 2147483648
    %v301 = vor.u32 1.1754944e-38, %v300
    %v302 = vsel %vm299, %v301, %v297
    %v303 = vmul.f32 1.0, %v302
    %v304 = vtanh.pop %v284
    %v305 = vmul.f32 %v303, %v249
    %307 = vrot.lane.b32.xlu0 %v304, 64
    %v308 = vpop.permute.xlu0 %307
    %v310 = vmul.f32 %v303, %v308
    %312 = vrot.lane.b32.xlu0 %v310, 32
    %v313 = vpop.permute.xlu0 %312
    %v315 = vadd.f32 %v305, %v313
    %v316 = vtanh.pop %v315
    %318 = vrot.lane.b32.xlu0 %v316, 64
    %v319 = vpop.permute.xlu0 %318
    %v321 = vmul.f32 %v303, %v319
    %323 = vrot.lane.b32.xlu0 %v321, 32
    %v324 = vpop.permute.xlu0 %323
    %326 = vst.msk [vmem:[#allocation2 + $0x8] sm:$0xff] %vm194, %v324
    %v327 = vld [vmem:[#allocation3 + $0x10] sm:$0xff]
    %v328 = vsel %vm194, %v324, 0
    %330 = vmatpush.msra.mxu0 0.0
    %331 = vmatpush.msra.mxu0 0.0
    %332 = vmatpush.msra.mxu0 0.0
    %333 = vmatpush.msra.mxu0 0.0
    %334 = vmatpush.msra.mxu0 0.0
    %335 = vmatpush.msra.mxu0 0.0
    %336 = vmatpush.msra.mxu0 0.0
    %337 = vmatpush.msra.mxu0 0.0
    %338 = vmatpush.msra.mxu0 0.0
    %339 = vmatpush.msra.mxu0 0.0
    %340 = vmatpush.msra.mxu0 0.0
    %341 = vmatpush.msra.mxu0 0.0
    %342 = vmatpush.msra.mxu0 %v192
    %343 = vmatpush.msra.mxu0 %v191
    %344 = vmatpush.msra.mxu0 %v190
    %345 = vmatpush.msra.mxu0 %v189
    %346 = vmatmul.f32.gmra.mxu0 %v328
    %v347 = vpop.f32.mrf.mxu0
    %v348 = vadd.f32 0.0, %v347
    %349 = vdwg.mxu0
    %v350 = vadd.f32 %v327, %v348
    %v351 = vxor.u32 %v350, 2147483648
    %v352 = vmul.f32 %v351, 1.442695
    %v353 = vpow.pop %v352
    %v354 = vadd.f32 %v353, 1.0
    %v355 = vrcp.pop %v354
    %v356 = vmul.f32 %v354, %v355
    %v357 = vsub.f32 1.0, %v356
    %v358 = vmul.f32 %v355, %v357
    %v359 = vadd.f32 %v355, %v358
    %vm360 = vweird.f32 %v354
    %vm361 = vweird.f32 %v355
    %vm362 = vmor %vm360, %vm361
    %v363 = vsel %vm362, %v355, %v359
    %v364 = vand.u32 2147483647, %v354
    %vm365 = vcmp.eq.f32.partialorder %v364, 8.507059e+37
    %v366 = vand.u32 %v354, 2147483648
    %v367 = vor.u32 1.1754944e-38, %v366
    %v368 = vsel %vm365, %v367, %v363
    %v369 = vmul.f32 1.0, %v368
    %v370 = vtanh.pop %v350
    %v371 = vmul.f32 %v369, %v315
    %373 = vrot.lane.b32.xlu0 %v370, 64
    %v374 = vpop.permute.xlu0 %373
    %v376 = vmul.f32 %v369, %v374
    %378 = vrot.lane.b32.xlu0 %v376, 32
    %v379 = vpop.permute.xlu0 %378
    %v381 = vadd.f32 %v371, %v379
    %v382 = vtanh.pop %v381
    %384 = vrot.lane.b32.xlu0 %v382, 64
    %v385 = vpop.permute.xlu0 %384
    %v387 = vmul.f32 %v369, %v385
    %389 = vrot.lane.b32.xlu0 %v387, 32
    %v390 = vpop.permute.xlu0 %389
    %392 = vst.msk [vmem:[#allocation2 + $0x10] sm:$0xff] %vm194, %v390
    %v393 = vld [vmem:[#allocation3 + $0x18] sm:$0xff]
    %v394 = vsel %vm194, %v390, 0
    %396 = vmatpush.msra.mxu0 0.0
    %397 = vmatpush.msra.mxu0 0.0
    %398 = vmatpush.msra.mxu0 0.0
    %399 = vmatpush.msra.mxu0 0.0
    %400 = vmatpush.msra.mxu0 0.0
    %401 = vmatpush.msra.mxu0 0.0
    %402 = vmatpush.msra.mxu0 0.0
    %403 = vmatpush.msra.mxu0 0.0
    %404 = vmatpush.msra.mxu0 0.0
    %405 = vmatpush.msra.mxu0 0.0
    %406 = vmatpush.msra.mxu0 0.0
    %407 = vmatpush.msra.mxu0 0.0
    %408 = vmatpush.msra.mxu0 %v192
    %409 = vmatpush.msra.mxu0 %v191
    %410 = vmatpush.msra.mxu0 %v190
    %411 = vmatpush.msra.mxu0 %v189
    %412 = vmatmul.f32.gmra.mxu0 %v394
    %v413 = vpop.f32.mrf.mxu0
    %v414 = vadd.f32 0.0, %v413
    %415 = vdwg.mxu0
    %v416 = vadd.f32 %v393, %v414
    %v417 = vxor.u32 %v416, 2147483648
    %v418 = vmul.f32 %v417, 1.442695
    %v419 = vpow.pop %v418
    %v420 = vadd.f32 %v419, 1.0
    %v421 = vrcp.pop %v420
    %v422 = vmul.f32 %v420, %v421
    %v423 = vsub.f32 1.0, %v422
    %v424 = vmul.f32 %v421, %v423
    %v425 = vadd.f32 %v421, %v424
    %vm426 = vweird.f32 %v420
    %vm427 = vweird.f32 %v421
    %vm428 = vmor %vm426, %vm427
    %v429 = vsel %vm428, %v421, %v425
    %v430 = vand.u32 2147483647, %v420
    %vm431 = vcmp.eq.f32.partialorder %v430, 8.507059e+37
    %v432 = vand.u32 %v420, 2147483648
    %v433 = vor.u32 1.1754944e-38, %v432
    %v434 = vsel %vm431, %v433, %v429
    %v435 = vmul.f32 1.0, %v434
    %v436 = vtanh.pop %v416
    %v437 = vmul.f32 %v435, %v381
    %439 = vrot.lane.b32.xlu0 %v436, 64
    %v440 = vpop.permute.xlu0 %439
    %v442 = vmul.f32 %v435, %v440
    %444 = vrot.lane.b32.xlu0 %v442, 32
    %v445 = vpop.permute.xlu0 %444
    %v447 = vadd.f32 %v437, %v445
    %v448 = vtanh.pop %v447
    %450 = vrot.lane.b32.xlu0 %v448, 64
    %v451 = vpop.permute.xlu0 %450
    %v453 = vmul.f32 %v435, %v451
    %455 = vrot.lane.b32.xlu0 %v453, 32
    %v456 = vpop.permute.xlu0 %455
    %458 = vst.msk [vmem:[#allocation2 + $0x18] sm:$0xff] %vm194, %v456
    %v459 = vld [vmem:[#allocation3 + $0x20] sm:$0xff]
    %v460 = vsel %vm194, %v456, 0
    %462 = vmatpush.msra.mxu0 0.0
    %463 = vmatpush.msra.mxu0 0.0
    %464 = vmatpush.msra.mxu0 0.0
    %465 = vmatpush.msra.mxu0 0.0
    %466 = vmatpush.msra.mxu0 0.0
    %467 = vmatpush.msra.mxu0 0.0
    %468 = vmatpush.msra.mxu0 0.0
    %469 = vmatpush.msra.mxu0 0.0
    %470 = vmatpush.msra.mxu0 0.0
    %471 = vmatpush.msra.mxu0 0.0
    %472 = vmatpush.msra.mxu0 0.0
    %473 = vmatpush.msra.mxu0 0.0
    %474 = vmatpush.msra.mxu0 %v192
    %475 = vmatpush.msra.mxu0 %v191
    %476 = vmatpush.msra.mxu0 %v190
    %477 = vmatpush.msra.mxu0 %v189
    %478 = vmatmul.f32.gmra.mxu0 %v460
    %v479 = vpop.f32.mrf.mxu0
    %v480 = vadd.f32 0.0, %v479
    %481 = vdwg.mxu0
    %v482 = vadd.f32 %v459, %v480
    %v483 = vxor.u32 %v482, 2147483648
    %v484 = vmul.f32 %v483, 1.442695
    %v485 = vpow.pop %v484
    %v486 = vadd.f32 %v485, 1.0
    %v487 = vrcp.pop %v486
    %v488 = vmul.f32 %v486, %v487
    %v489 = vsub.f32 1.0, %v488
    %v490 = vmul.f32 %v487, %v489
    %v491 = vadd.f32 %v487, %v490
    %vm492 = vweird.f32 %v486
    %vm493 = vweird.f32 %v487
    %vm494 = vmor %vm492, %vm493
    %v495 = vsel %vm494, %v487, %v491
    %v496 = vand.u32 2147483647, %v486
    %vm497 = vcmp.eq.f32.partialorder %v496, 8.507059e+37
    %v498 = vand.u32 %v486, 2147483648
    %v499 = vor.u32 1.1754944e-38, %v498
    %v500 = vsel %vm497, %v499, %v495
    %v501 = vmul.f32 1.0, %v500
    %v502 = vtanh.pop %v482
    %v503 = vmul.f32 %v501, %v447
    %505 = vrot.lane.b32.xlu0 %v502, 64
    %v506 = vpop.permute.xlu0 %505
    %v508 = vmul.f32 %v501, %v506
    %510 = vrot.lane.b32.xlu0 %v508, 32
    %v511 = vpop.permute.xlu0 %510
    %v513 = vadd.f32 %v503, %v511
    %v514 = vtanh.pop %v513
    %516 = vrot.lane.b32.xlu0 %v514, 64
    %v517 = vpop.permute.xlu0 %516
    %v519 = vmul.f32 %v501, %v517
    %521 = vrot.lane.b32.xlu0 %v519, 32
    %v522 = vpop.permute.xlu0 %521
    %524 = vst.msk [vmem:[#allocation2 + $0x20] sm:$0xff] %vm194, %v522
    %v525 = vld [vmem:[#allocation3 + $0x28] sm:$0xff]
    %v526 = vsel %vm194, %v522, 0
    %528 = vmatpush.msra.mxu0 0.0
    %529 = vmatpush.msra.mxu0 0.0
    %530 = vmatpush.msra.mxu0 0.0
    %531 = vmatpush.msra.mxu0 0.0
    %532 = vmatpush.msra.mxu0 0.0
    %533 = vmatpush.msra.mxu0 0.0
    %534 = vmatpush.msra.mxu0 0.0
    %535 = vmatpush.msra.mxu0 0.0
    %536 = vmatpush.msra.mxu0 0.0
    %537 = vmatpush.msra.mxu0 0.0
    %538 = vmatpush.msra.mxu0 0.0
    %539 = vmatpush.msra.mxu0 0.0
    %540 = vmatpush.msra.mxu0 %v192
    %541 = vmatpush.msra.mxu0 %v191
    %542 = vmatpush.msra.mxu0 %v190
    %543 = vmatpush.msra.mxu0 %v189
    %544 = vmatmul.f32.gmra.mxu0 %v526
    %v545 = vpop.f32.mrf.mxu0
    %v546 = vadd.f32 0.0, %v545
    %547 = vdwg.mxu0
    %v548 = vadd.f32 %v525, %v546
    %v549 = vxor.u32 %v548, 2147483648
    %v550 = vmul.f32 %v549, 1.442695
    %v551 = vpow.pop %v550
    %v552 = vadd.f32 %v551, 1.0
    %v553 = vrcp.pop %v552
    %v554 = vmul.f32 %v552, %v553
    %v555 = vsub.f32 1.0, %v554
    %v556 = vmul.f32 %v553, %v555
    %v557 = vadd.f32 %v553, %v556
    %vm558 = vweird.f32 %v552
    %vm559 = vweird.f32 %v553
    %vm560 = vmor %vm558, %vm559
    %v561 = vsel %vm560, %v553, %v557
    %v562 = vand.u32 2147483647, %v552
    %vm563 = vcmp.eq.f32.partialorder %v562, 8.507059e+37
    %v564 = vand.u32 %v552, 2147483648
    %v565 = vor.u32 1.1754944e-38, %v564
    %v566 = vsel %vm563, %v565, %v561
    %v567 = vmul.f32 1.0, %v566
    %v568 = vtanh.pop %v548
    %v569 = vmul.f32 %v567, %v513
    %571 = vrot.lane.b32.xlu0 %v568, 64
    %v572 = vpop.permute.xlu0 %571
    %v574 = vmul.f32 %v567, %v572
    %576 = vrot.lane.b32.xlu0 %v574, 32
    %v577 = vpop.permute.xlu0 %576
    %v579 = vadd.f32 %v569, %v577
    %v580 = vtanh.pop %v579
    %582 = vrot.lane.b32.xlu0 %v580, 64
    %v583 = vpop.permute.xlu0 %582
    %v585 = vmul.f32 %v567, %v583
    %587 = vrot.lane.b32.xlu0 %v585, 32
    %v588 = vpop.permute.xlu0 %587
    %590 = vst.msk [vmem:[#allocation2 + $0x28] sm:$0xff] %vm194, %v588
    %v591 = vld [vmem:[#allocation3 + $0x30] sm:$0xff]
    %v592 = vsel %vm194, %v588, 0
    %594 = vmatpush.msra.mxu0 0.0
    %595 = vmatpush.msra.mxu0 0.0
    %596 = vmatpush.msra.mxu0 0.0
    %597 = vmatpush.msra.mxu0 0.0
    %598 = vmatpush.msra.mxu0 0.0
    %599 = vmatpush.msra.mxu0 0.0
    %600 = vmatpush.msra.mxu0 0.0
    %601 = vmatpush.msra.mxu0 0.0
    %602 = vmatpush.msra.mxu0 0.0
    %603 = vmatpush.msra.mxu0 0.0
    %604 = vmatpush.msra.mxu0 0.0
    %605 = vmatpush.msra.mxu0 0.0
    %606 = vmatpush.msra.mxu0 %v192
    %607 = vmatpush.msra.mxu0 %v191
    %608 = vmatpush.msra.mxu0 %v190
    %609 = vmatpush.msra.mxu0 %v189
    %610 = vmatmul.f32.gmra.mxu0 %v592
    %v611 = vpop.f32.mrf.mxu0
    %v612 = vadd.f32 0.0, %v611
    %613 = vdwg.mxu0
    %v614 = vadd.f32 %v591, %v612
    %v615 = vxor.u32 %v614, 2147483648
    %v616 = vmul.f32 %v615, 1.442695
    %v617 = vpow.pop %v616
    %v618 = vadd.f32 %v617, 1.0
    %v619 = vrcp.pop %v618
    %v620 = vmul.f32 %v618, %v619
    %v621 = vsub.f32 1.0, %v620
    %v622 = vmul.f32 %v619, %v621
    %v623 = vadd.f32 %v619, %v622
    %vm624 = vweird.f32 %v618
    %vm625 = vweird.f32 %v619
    %vm626 = vmor %vm624, %vm625
    %v627 = vsel %vm626, %v619, %v623
    %v628 = vand.u32 2147483647, %v618
    %vm629 = vcmp.eq.f32.partialorder %v628, 8.507059e+37
    %v630 = vand.u32 %v618, 2147483648
    %v631 = vor.u32 1.1754944e-38, %v630
    %v632 = vsel %vm629, %v631, %v627
    %v633 = vmul.f32 1.0, %v632
    %v634 = vtanh.pop %v614
    %v635 = vmul.f32 %v633, %v579
    %637 = vrot.lane.b32.xlu0 %v634, 64
    %v638 = vpop.permute.xlu0 %637
    %v640 = vmul.f32 %v633, %v638
    %642 = vrot.lane.b32.xlu0 %v640, 32
    %v643 = vpop.permute.xlu0 %642
    %v645 = vadd.f32 %v635, %v643
    %v646 = vtanh.pop %v645
    %648 = vrot.lane.b32.xlu0 %v646, 64
    %v649 = vpop.permute.xlu0 %648
    %v651 = vmul.f32 %v633, %v649
    %653 = vrot.lane.b32.xlu0 %v651, 32
    %v654 = vpop.permute.xlu0 %653
    %656 = vst.msk [vmem:[#allocation2 + $0x30] sm:$0xff] %vm194, %v654
    %v657 = vld [vmem:[#allocation3 + $0x38] sm:$0xff]
    %v658 = vsel %vm194, %v654, 0
    %660 = vmatpush.msra.mxu0 0.0
    %661 = vmatpush.msra.mxu0 0.0
    %662 = vmatpush.msra.mxu0 0.0
    %663 = vmatpush.msra.mxu0 0.0
    %664 = vmatpush.msra.mxu0 0.0
    %665 = vmatpush.msra.mxu0 0.0
    %666 = vmatpush.msra.mxu0 0.0
    %667 = vmatpush.msra.mxu0 0.0
    %668 = vmatpush.msra.mxu0 0.0
    %669 = vmatpush.msra.mxu0 0.0
    %670 = vmatpush.msra.mxu0 0.0
    %671 = vmatpush.msra.mxu0 0.0
    %672 = vmatpush.msra.mxu0 %v192
    %673 = vmatpush.msra.mxu0 %v191
    %674 = vmatpush.msra.mxu0 %v190
    %675 = vmatpush.msra.mxu0 %v189
    %676 = vmatmul.f32.gmra.mxu0 %v658
    %v677 = vpop.f32.mrf.mxu0
    %v678 = vadd.f32 0.0, %v677
    %679 = vdwg.mxu0
    %v680 = vadd.f32 %v657, %v678
    %v681 = vxor.u32 %v680, 2147483648
    %v682 = vmul.f32 %v681, 1.442695
    %v683 = vpow.pop %v682
    %v684 = vadd.f32 %v683, 1.0
    %v685 = vrcp.pop %v684
    %v686 = vmul.f32 %v684, %v685
    %v687 = vsub.f32 1.0, %v686
    %v688 = vmul.f32 %v685, %v687
    %v689 = vadd.f32 %v685, %v688
    %vm690 = vweird.f32 %v684
    %vm691 = vweird.f32 %v685
    %vm692 = vmor %vm690, %vm691
    %v693 = vsel %vm692, %v685, %v689
    %v694 = vand.u32 2147483647, %v684
    %vm695 = vcmp.eq.f32.partialorder %v694, 8.507059e+37
    %v696 = vand.u32 %v684, 2147483648
    %v697 = vor.u32 1.1754944e-38, %v696
    %v698 = vsel %vm695, %v697, %v693
    %v699 = vmul.f32 1.0, %v698
    %v700 = vtanh.pop %v680
    %v701 = vmul.f32 %v699, %v645
    %703 = vrot.lane.b32.xlu0 %v700, 64
    %v704 = vpop.permute.xlu0 %703
    %v706 = vmul.f32 %v699, %v704
    %708 = vrot.lane.b32.xlu0 %v706, 32
    %v709 = vpop.permute.xlu0 %708
    %v711 = vadd.f32 %v701, %v709
    %v712 = vtanh.pop %v711
    %714 = vrot.lane.b32.xlu0 %v712, 64
    %v715 = vpop.permute.xlu0 %714
    %v717 = vmul.f32 %v699, %v715
    %719 = vrot.lane.b32.xlu0 %v717, 32
    %v720 = vpop.permute.xlu0 %719
    %722 = vst.msk [vmem:[#allocation2 + $0x38] sm:$0xff] %vm194, %v720
    %v723 = vld [vmem:[#allocation2] sm:$0xff]
    %v724 = vld [vmem:[#allocation2 + $0x8] sm:$0xff]
    %v725 = vld [vmem:[#allocation2 + $0x10] sm:$0xff]
    %v726 = vld [vmem:[#allocation2 + $0x18] sm:$0xff]
    %v727 = vld [vmem:[#allocation2 + $0x20] sm:$0xff]
    %v728 = vld [vmem:[#allocation2 + $0x28] sm:$0xff]
    %v729 = vld [vmem:[#allocation2 + $0x30] sm:$0xff]
    %v730 = vld [vmem:[#allocation2 + $0x38] sm:$0xff]
    %v731 = vld [vmem:[#allocation9] sm:$0xff]
    %v732 = vld [vmem:[#allocation9 + $0x8] sm:$0xff]
    %v733 = vld [vmem:[#allocation9 + $0x10] sm:$0xff]
    %v734 = vld [vmem:[#allocation9 + $0x18] sm:$0xff]
    %v735 = vld [vmem:[%s7] sm:$0x1]
    %v737 = vperm.slane %v735, 0
    %v740 = vsel %vm194, %v723, 0
    %v743 = vsel %vm194, %v724, 0
    %v746 = vsel %vm194, %v725, 0
    %v749 = vsel %vm194, %v726, 0
    %v752 = vsel %vm194, %v727, 0
    %v755 = vsel %vm194, %v728, 0
    %v758 = vsel %vm194, %v729, 0
    %v761 = vsel %vm194, %v730, 0
    %763 = vmatpush.msra.mxu0 0.0
    %764 = vmatpush.msra.mxu0 0.0
    %765 = vmatpush.msra.mxu0 0.0
    %766 = vmatpush.msra.mxu0 0.0
    %767 = vmatpush.msra.mxu0 0.0
    %768 = vmatpush.msra.mxu0 0.0
    %769 = vmatpush.msra.mxu0 0.0
    %770 = vmatpush.msra.mxu0 0.0
    %771 = vmatpush.msra.mxu0 0.0
    %772 = vmatpush.msra.mxu0 0.0
    %773 = vmatpush.msra.mxu0 0.0
    %774 = vmatpush.msra.mxu0 0.0
    %775 = vmatpush.msra.mxu0 %v734
    %776 = vmatpush.msra.mxu0 %v733
    %777 = vmatpush.msra.mxu0 %v732
    %778 = vmatpush.msra.mxu0 %v731
    %779 = vmatmul.f32.gmra.mxu0 %v740
    %v780 = vpop.f32.mrf.mxu0
    %v781 = vadd.f32 %v737, %v780
    %782 = vmatmul.f32.gmra.mxu0 %v743
    %v783 = vpop.f32.mrf.mxu0
    %v784 = vadd.f32 %v737, %v783
    %785 = vmatmul.f32.gmra.mxu0 %v746
    %v786 = vpop.f32.mrf.mxu0
    %v787 = vadd.f32 %v737, %v786
    %788 = vmatmul.f32.gmra.mxu0 %v749
    %v789 = vpop.f32.mrf.mxu0
    %v790 = vadd.f32 %v737, %v789
    %791 = vmatmul.f32.gmra.mxu0 %v752
    %v792 = vpop.f32.mrf.mxu0
    %v793 = vadd.f32 %v737, %v792
    %794 = vmatmul.f32.gmra.mxu0 %v755
    %v795 = vpop.f32.mrf.mxu0
    %v796 = vadd.f32 %v737, %v795
    %797 = vmatmul.f32.gmra.mxu0 %v758
    %v798 = vpop.f32.mrf.mxu0
    %v799 = vadd.f32 %v737, %v798
    %800 = vmatmul.f32.gmra.mxu0 %v761
    %v801 = vpop.f32.mrf.mxu0
    %v802 = vadd.f32 %v737, %v801
    %803 = vdwg.mxu0
    %804 = vst [vmem:[#allocation3] sm:$0xff] %v781
    %805 = vst [vmem:[#allocation3 + $0x8] sm:$0xff] %v784
    %806 = vst [vmem:[#allocation3 + $0x10] sm:$0xff] %v787
    %807 = vst [vmem:[#allocation3 + $0x18] sm:$0xff] %v790
    %808 = vst [vmem:[#allocation3 + $0x20] sm:$0xff] %v793
    %809 = vst [vmem:[#allocation3 + $0x28] sm:$0xff] %v796
    %810 = vst [vmem:[#allocation3 + $0x30] sm:$0xff] %v799
    %811 = vst [vmem:[#allocation3 + $0x38] sm:$0xff] %v802
    %v812 = vld [vmem:[#allocation10] sm:$0xff]
    %v813 = vld [vmem:[#allocation10 + $0x8] sm:$0xff]
    %v814 = vld [vmem:[#allocation10 + $0x10] sm:$0xff]
    %v815 = vld [vmem:[#allocation10 + $0x18] sm:$0xff]
    %v816 = vld [vmem:[#allocation3] sm:$0xff]
    %817 = vmatpush.msra.mxu0 0.0
    %818 = vmatpush.msra.mxu0 0.0
    %819 = vmatpush.msra.mxu0 0.0
    %820 = vmatpush.msra.mxu0 0.0
    %821 = vmatpush.msra.mxu0 0.0
    %822 = vmatpush.msra.mxu0 0.0
    %823 = vmatpush.msra.mxu0 0.0
    %824 = vmatpush.msra.mxu0 0.0
    %825 = vmatpush.msra.mxu0 0.0
    %826 = vmatpush.msra.mxu0 0.0
    %827 = vmatpush.msra.mxu0 0.0
    %828 = vmatpush.msra.mxu0 0.0
    %829 = vmatpush.msra.mxu0 %v815
    %830 = vmatpush.msra.mxu0 %v814
    %831 = vmatpush.msra.mxu0 %v813
    %832 = vmatpush.msra.mxu0 %v812
    %833 = vmatmul.f32.gmra.mxu0 %v196
    %v834 = vpop.f32.mrf.mxu0
    %v835 = vadd.f32 0.0, %v834
    %836 = vdwg.mxu0
    %v837 = vadd.f32 %v816, %v835
    %v838 = vxor.u32 %v837, 2147483648
    %v839 = vmul.f32 %v838, 1.442695
    %v840 = vpow.pop %v839
    %v841 = vadd.f32 %v840, 1.0
    %v842 = vrcp.pop %v841
    %v843 = vmul.f32 %v841, %v842
    %v844 = vsub.f32 1.0, %v843
    %v845 = vmul.f32 %v842, %v844
    %v846 = vadd.f32 %v842, %v845
    %vm847 = vweird.f32 %v841
    %vm848 = vweird.f32 %v842
    %vm849 = vmor %vm847, %vm848
    %v850 = vsel %vm849, %v842, %v846
    %v851 = vand.u32 2147483647, %v841
    %vm852 = vcmp.eq.f32.partialorder %v851, 8.507059e+37
    %v853 = vand.u32 %v841, 2147483648
    %v854 = vor.u32 1.1754944e-38, %v853
    %v855 = vsel %vm852, %v854, %v850
    %v856 = vmul.f32 1.0, %v855
    %v857 = vtanh.pop %v837
    %v858 = vmul.f32 %v856, 0.0
    %860 = vrot.lane.b32.xlu0 %v857, 64
    %v861 = vpop.permute.xlu0 %860
    %v863 = vmul.f32 %v856, %v861
    %865 = vrot.lane.b32.xlu0 %v863, 32
    %v866 = vpop.permute.xlu0 %865
    %v868 = vadd.f32 %v858, %v866
    %v869 = vtanh.pop %v868
    %871 = vrot.lane.b32.xlu0 %v869, 64
    %v872 = vpop.permute.xlu0 %871
    %v874 = vmul.f32 %v856, %v872
    %vm875 = vcmp.eq.s32.totalorder %v100, 1
    %v876 = vsel %vm875, 1, 0
    %877 = vset.pattern.permute.xlu0 0
    %878 = vperm.xlu0 %877, %v876
    %v879 = vpop.permute.xlu0 %878
    %vm880 = vcmp.eq.s32.totalorder %v879, 1
    %v881 = vsel %vm880, %v874, 0.0
    %v882 = vld [vmem:[#allocation3 + $0x8] sm:$0xff]
    %884 = vrot.lane.b32.xlu0 %v874, 32
    %v885 = vpop.permute.xlu0 %884
    %v886 = vsel %vm194, %v885, 0
    %888 = vmatpush.msra.mxu0 0.0
    %889 = vmatpush.msra.mxu0 0.0
    %890 = vmatpush.msra.mxu0 0.0
    %891 = vmatpush.msra.mxu0 0.0
    %892 = vmatpush.msra.mxu0 0.0
    %893 = vmatpush.msra.mxu0 0.0
    %894 = vmatpush.msra.mxu0 0.0
    %895 = vmatpush.msra.mxu0 0.0
    %896 = vmatpush.msra.mxu0 0.0
    %897 = vmatpush.msra.mxu0 0.0
    %898 = vmatpush.msra.mxu0 0.0
    %899 = vmatpush.msra.mxu0 0.0
    %900 = vmatpush.msra.mxu0 %v815
    %901 = vmatpush.msra.mxu0 %v814
    %902 = vmatpush.msra.mxu0 %v813
    %903 = vmatpush.msra.mxu0 %v812
    %904 = vmatmul.f32.gmra.mxu0 %v886
    %v905 = vpop.f32.mrf.mxu0
    %v906 = vadd.f32 0.0, %v905
    %907 = vdwg.mxu0
    %v908 = vadd.f32 %v882, %v906
    %v909 = vxor.u32 %v908, 2147483648
    %v910 = vmul.f32 %v909, 1.442695
    %v911 = vpow.pop %v910
    %v912 = vadd.f32 %v911, 1.0
    %v913 = vrcp.pop %v912
    %v914 = vmul.f32 %v912, %v913
    %v915 = vsub.f32 1.0, %v914
    %v916 = vmul.f32 %v913, %v915
    %v917 = vadd.f32 %v913, %v916
    %vm918 = vweird.f32 %v912
    %vm919 = vweird.f32 %v913
    %vm920 = vmor %vm918, %vm919
    %v921 = vsel %vm920, %v913, %v917
    %v922 = vand.u32 2147483647, %v912
    %vm923 = vcmp.eq.f32.partialorder %v922, 8.507059e+37
    %v924 = vand.u32 %v912, 2147483648
    %v925 = vor.u32 1.1754944e-38, %v924
    %v926 = vsel %vm923, %v925, %v921
    %v927 = vmul.f32 1.0, %v926
    %v928 = vtanh.pop %v908
    %v929 = vmul.f32 %v927, %v868
    %931 = vrot.lane.b32.xlu0 %v928, 64
    %v932 = vpop.permute.xlu0 %931
    %v934 = vmul.f32 %v927, %v932
    %936 = vrot.lane.b32.xlu0 %v934, 32
    %v937 = vpop.permute.xlu0 %936
    %v939 = vadd.f32 %v929, %v937
    %v940 = vtanh.pop %v939
    %942 = vrot.lane.b32.xlu0 %v940, 64
    %v943 = vpop.permute.xlu0 %942
    %v945 = vmul.f32 %v927, %v943
    %vm946 = vcmp.eq.s32.totalorder %v100, 2
    %v947 = vsel %vm946, 1, 0
    %948 = vset.pattern.permute.xlu0 0
    %949 = vperm.xlu0 %948, %v947
    %v950 = vpop.permute.xlu0 %949
    %vm951 = vcmp.eq.s32.totalorder %v950, 1
    %v952 = vsel %vm951, %v945, %v881
    %v953 = vld [vmem:[#allocation3 + $0x10] sm:$0xff]
    %955 = vrot.lane.b32.xlu0 %v945, 32
    %v956 = vpop.permute.xlu0 %955
    %v957 = vsel %vm194, %v956, 0
    %959 = vmatpush.msra.mxu0 0.0
    %960 = vmatpush.msra.mxu0 0.0
    %961 = vmatpush.msra.mxu0 0.0
    %962 = vmatpush.msra.mxu0 0.0
    %963 = vmatpush.msra.mxu0 0.0
    %964 = vmatpush.msra.mxu0 0.0
    %965 = vmatpush.msra.mxu0 0.0
    %966 = vmatpush.msra.mxu0 0.0
    %967 = vmatpush.msra.mxu0 0.0
    %968 = vmatpush.msra.mxu0 0.0
    %969 = vmatpush.msra.mxu0 0.0
    %970 = vmatpush.msra.mxu0 0.0
    %971 = vmatpush.msra.mxu0 %v815
    %972 = vmatpush.msra.mxu0 %v814
    %973 = vmatpush.msra.mxu0 %v813
    %974 = vmatpush.msra.mxu0 %v812
    %975 = vmatmul.f32.gmra.mxu0 %v957
    %v976 = vpop.f32.mrf.mxu0
    %v977 = vadd.f32 0.0, %v976
    %978 = vdwg.mxu0
    %v979 = vadd.f32 %v953, %v977
    %v980 = vxor.u32 %v979, 2147483648
    %v981 = vmul.f32 %v980, 1.442695
    %v982 = vpow.pop %v981
    %v983 = vadd.f32 %v982, 1.0
    %v984 = vrcp.pop %v983
    %v985 = vmul.f32 %v983, %v984
    %v986 = vsub.f32 1.0, %v985
    %v987 = vmul.f32 %v984, %v986
    %v988 = vadd.f32 %v984, %v987
    %vm989 = vweird.f32 %v983
    %vm990 = vweird.f32 %v984
    %vm991 = vmor %vm989, %vm990
    %v992 = vsel %vm991, %v984, %v988
    %v993 = vand.u32 2147483647, %v983
    %vm994 = vcmp.eq.f32.partialorder %v993, 8.507059e+37
    %v995 = vand.u32 %v983, 2147483648
    %v996 = vor.u32 1.1754944e-38, %v995
    %v997 = vsel %vm994, %v996, %v992
    %v998 = vmul.f32 1.0, %v997
    %v999 = vtanh.pop %v979
    %v1000 = vmul.f32 %v998, %v939
    %1002 = vrot.lane.b32.xlu0 %v999, 64
    %v1003 = vpop.permute.xlu0 %1002
    %v1005 = vmul.f32 %v998, %v1003
    %1007 = vrot.lane.b32.xlu0 %v1005, 32
    %v1008 = vpop.permute.xlu0 %1007
    %v1010 = vadd.f32 %v1000, %v1008
    %v1011 = vtanh.pop %v1010
    %1013 = vrot.lane.b32.xlu0 %v1011, 64
    %v1014 = vpop.permute.xlu0 %1013
    %v1016 = vmul.f32 %v998, %v1014
    %vm1017 = vcmp.eq.s32.totalorder %v100, 3
    %v1018 = vsel %vm1017, 1, 0
    %1019 = vset.pattern.permute.xlu0 0
    %1020 = vperm.xlu0 %1019, %v1018
    %v1021 = vpop.permute.xlu0 %1020
    %vm1022 = vcmp.eq.s32.totalorder %v1021, 1
    %v1023 = vsel %vm1022, %v1016, %v952
    %v1024 = vld [vmem:[#allocation3 + $0x18] sm:$0xff]
    %1026 = vrot.lane.b32.xlu0 %v1016, 32
    %v1027 = vpop.permute.xlu0 %1026
    %v1028 = vsel %vm194, %v1027, 0
    %1030 = vmatpush.msra.mxu0 0.0
    %1031 = vmatpush.msra.mxu0 0.0
    %1032 = vmatpush.msra.mxu0 0.0
    %1033 = vmatpush.msra.mxu0 0.0
    %1034 = vmatpush.msra.mxu0 0.0
    %1035 = vmatpush.msra.mxu0 0.0
    %1036 = vmatpush.msra.mxu0 0.0
    %1037 = vmatpush.msra.mxu0 0.0
    %1038 = vmatpush.msra.mxu0 0.0
    %1039 = vmatpush.msra.mxu0 0.0
    %1040 = vmatpush.msra.mxu0 0.0
    %1041 = vmatpush.msra.mxu0 0.0
    %1042 = vmatpush.msra.mxu0 %v815
    %1043 = vmatpush.msra.mxu0 %v814
    %1044 = vmatpush.msra.mxu0 %v813
    %1045 = vmatpush.msra.mxu0 %v812
    %1046 = vmatmul.f32.gmra.mxu0 %v1028
    %v1047 = vpop.f32.mrf.mxu0
    %v1048 = vadd.f32 0.0, %v1047
    %1049 = vdwg.mxu0
    %v1050 = vadd.f32 %v1024, %v1048
    %v1051 = vxor.u32 %v1050, 2147483648
    %v1052 = vmul.f32 %v1051, 1.442695
    %v1053 = vpow.pop %v1052
    %v1054 = vadd.f32 %v1053, 1.0
    %v1055 = vrcp.pop %v1054
    %v1056 = vmul.f32 %v1054, %v1055
    %v1057 = vsub.f32 1.0, %v1056
    %v1058 = vmul.f32 %v1055, %v1057
    %v1059 = vadd.f32 %v1055, %v1058
    %vm1060 = vweird.f32 %v1054
    %vm1061 = vweird.f32 %v1055
    %vm1062 = vmor %vm1060, %vm1061
    %v1063 = vsel %vm1062, %v1055, %v1059
    %v1064 = vand.u32 2147483647, %v1054
    %vm1065 = vcmp.eq.f32.partialorder %v1064, 8.507059e+37
    %v1066 = vand.u32 %v1054, 2147483648
    %v1067 = vor.u32 1.1754944e-38, %v1066
    %v1068 = vsel %vm1065, %v1067, %v1063
    %v1069 = vmul.f32 1.0, %v1068
    %v1070 = vtanh.pop %v1050
    %v1071 = vmul.f32 %v1069, %v1010
    %1073 = vrot.lane.b32.xlu0 %v1070, 64
    %v1074 = vpop.permute.xlu0 %1073
    %v1076 = vmul.f32 %v1069, %v1074
    %1078 = vrot.lane.b32.xlu0 %v1076, 32
    %v1079 = vpop.permute.xlu0 %1078
    %v1081 = vadd.f32 %v1071, %v1079
    %v1082 = vtanh.pop %v1081
    %1084 = vrot.lane.b32.xlu0 %v1082, 64
    %v1085 = vpop.permute.xlu0 %1084
    %v1087 = vmul.f32 %v1069, %v1085
    %vm1088 = vcmp.eq.s32.totalorder %v100, 4
    %v1089 = vsel %vm1088, 1, 0
    %1090 = vset.pattern.permute.xlu0 0
    %1091 = vperm.xlu0 %1090, %v1089
    %v1092 = vpop.permute.xlu0 %1091
    %vm1093 = vcmp.eq.s32.totalorder %v1092, 1
    %v1094 = vsel %vm1093, %v1087, %v1023
    %v1095 = vld [vmem:[#allocation3 + $0x20] sm:$0xff]
    %1097 = vrot.lane.b32.xlu0 %v1087, 32
    %v1098 = vpop.permute.xlu0 %1097
    %v1099 = vsel %vm194, %v1098, 0
    %1101 = vmatpush.msra.mxu0 0.0
    %1102 = vmatpush.msra.mxu0 0.0
    %1103 = vmatpush.msra.mxu0 0.0
    %1104 = vmatpush.msra.mxu0 0.0
    %1105 = vmatpush.msra.mxu0 0.0
    %1106 = vmatpush.msra.mxu0 0.0
    %1107 = vmatpush.msra.mxu0 0.0
    %1108 = vmatpush.msra.mxu0 0.0
    %1109 = vmatpush.msra.mxu0 0.0
    %1110 = vmatpush.msra.mxu0 0.0
    %1111 = vmatpush.msra.mxu0 0.0
    %1112 = vmatpush.msra.mxu0 0.0
    %1113 = vmatpush.msra.mxu0 %v815
    %1114 = vmatpush.msra.mxu0 %v814
    %1115 = vmatpush.msra.mxu0 %v813
    %1116 = vmatpush.msra.mxu0 %v812
    %1117 = vmatmul.f32.gmra.mxu0 %v1099
    %v1118 = vpop.f32.mrf.mxu0
    %v1119 = vadd.f32 0.0, %v1118
    %1120 = vdwg.mxu0
    %v1121 = vadd.f32 %v1095, %v1119
    %v1122 = vxor.u32 %v1121, 2147483648
    %v1123 = vmul.f32 %v1122, 1.442695
    %v1124 = vpow.pop %v1123
    %v1125 = vadd.f32 %v1124, 1.0
    %v1126 = vrcp.pop %v1125
    %v1127 = vmul.f32 %v1125, %v1126
    %v1128 = vsub.f32 1.0, %v1127
    %v1129 = vmul.f32 %v1126, %v1128
    %v1130 = vadd.f32 %v1126, %v1129
    %vm1131 = vweird.f32 %v1125
    %vm1132 = vweird.f32 %v1126
    %vm1133 = vmor %vm1131, %vm1132
    %v1134 = vsel %vm1133, %v1126, %v1130
    %v1135 = vand.u32 2147483647, %v1125
    %vm1136 = vcmp.eq.f32.partialorder %v1135, 8.507059e+37
    %v1137 = vand.u32 %v1125, 2147483648
    %v1138 = vor.u32 1.1754944e-38, %v1137
    %v1139 = vsel %vm1136, %v1138, %v1134
    %v1140 = vmul.f32 1.0, %v1139
    %v1141 = vtanh.pop %v1121
    %v1142 = vmul.f32 %v1140, %v1081
    %1144 = vrot.lane.b32.xlu0 %v1141, 64
    %v1145 = vpop.permute.xlu0 %1144
    %v1147 = vmul.f32 %v1140, %v1145
    %1149 = vrot.lane.b32.xlu0 %v1147, 32
    %v1150 = vpop.permute.xlu0 %1149
    %v1152 = vadd.f32 %v1142, %v1150
    %v1153 = vtanh.pop %v1152
    %1155 = vrot.lane.b32.xlu0 %v1153, 64
    %v1156 = vpop.permute.xlu0 %1155
    %v1158 = vmul.f32 %v1140, %v1156
    %vm1159 = vcmp.eq.s32.totalorder %v100, 5
    %v1160 = vsel %vm1159, 1, 0
    %1161 = vset.pattern.permute.xlu0 0
    %1162 = vperm.xlu0 %1161, %v1160
    %v1163 = vpop.permute.xlu0 %1162
    %vm1164 = vcmp.eq.s32.totalorder %v1163, 1
    %v1165 = vsel %vm1164, %v1158, %v1094
    %v1166 = vld [vmem:[#allocation3 + $0x28] sm:$0xff]
    %1168 = vrot.lane.b32.xlu0 %v1158, 32
    %v1169 = vpop.permute.xlu0 %1168
    %v1170 = vsel %vm194, %v1169, 0
    %1172 = vmatpush.msra.mxu0 0.0
    %1173 = vmatpush.msra.mxu0 0.0
    %1174 = vmatpush.msra.mxu0 0.0
    %1175 = vmatpush.msra.mxu0 0.0
    %1176 = vmatpush.msra.mxu0 0.0
    %1177 = vmatpush.msra.mxu0 0.0
    %1178 = vmatpush.msra.mxu0 0.0
    %1179 = vmatpush.msra.mxu0 0.0
    %1180 = vmatpush.msra.mxu0 0.0
    %1181 = vmatpush.msra.mxu0 0.0
    %1182 = vmatpush.msra.mxu0 0.0
    %1183 = vmatpush.msra.mxu0 0.0
    %1184 = vmatpush.msra.mxu0 %v815
    %1185 = vmatpush.msra.mxu0 %v814
    %1186 = vmatpush.msra.mxu0 %v813
    %1187 = vmatpush.msra.mxu0 %v812
    %1188 = vmatmul.f32.gmra.mxu0 %v1170
    %v1189 = vpop.f32.mrf.mxu0
    %v1190 = vadd.f32 0.0, %v1189
    %1191 = vdwg.mxu0
    %v1192 = vadd.f32 %v1166, %v1190
    %v1193 = vxor.u32 %v1192, 2147483648
    %v1194 = vmul.f32 %v1193, 1.442695
    %v1195 = vpow.pop %v1194
    %v1196 = vadd.f32 %v1195, 1.0
    %v1197 = vrcp.pop %v1196
    %v1198 = vmul.f32 %v1196, %v1197
    %v1199 = vsub.f32 1.0, %v1198
    %v1200 = vmul.f32 %v1197, %v1199
    %v1201 = vadd.f32 %v1197, %v1200
    %vm1202 = vweird.f32 %v1196
    %vm1203 = vweird.f32 %v1197
    %vm1204 = vmor %vm1202, %vm1203
    %v1205 = vsel %vm1204, %v1197, %v1201
    %v1206 = vand.u32 2147483647, %v1196
    %vm1207 = vcmp.eq.f32.partialorder %v1206, 8.507059e+37
    %v1208 = vand.u32 %v1196, 2147483648
    %v1209 = vor.u32 1.1754944e-38, %v1208
    %v1210 = vsel %vm1207, %v1209, %v1205
    %v1211 = vmul.f32 1.0, %v1210
    %v1212 = vtanh.pop %v1192
    %v1213 = vmul.f32 %v1211, %v1152
    %1215 = vrot.lane.b32.xlu0 %v1212, 64
    %v1216 = vpop.permute.xlu0 %1215
    %v1218 = vmul.f32 %v1211, %v1216
    %1220 = vrot.lane.b32.xlu0 %v1218, 32
    %v1221 = vpop.permute.xlu0 %1220
    %v1223 = vadd.f32 %v1213, %v1221
    %v1224 = vtanh.pop %v1223
    %1226 = vrot.lane.b32.xlu0 %v1224, 64
    %v1227 = vpop.permute.xlu0 %1226
    %v1229 = vmul.f32 %v1211, %v1227
    %vm1230 = vcmp.eq.s32.totalorder %v100, 6
    %v1231 = vsel %vm1230, 1, 0
    %1232 = vset.pattern.permute.xlu0 0
    %1233 = vperm.xlu0 %1232, %v1231
    %v1234 = vpop.permute.xlu0 %1233
    %vm1235 = vcmp.eq.s32.totalorder %v1234, 1
    %v1236 = vsel %vm1235, %v1229, %v1165
    %v1237 = vld [vmem:[#allocation3 + $0x30] sm:$0xff]
    %1239 = vrot.lane.b32.xlu0 %v1229, 32
    %v1240 = vpop.permute.xlu0 %1239
    %v1241 = vsel %vm194, %v1240, 0
    %1243 = vmatpush.msra.mxu0 0.0
    %1244 = vmatpush.msra.mxu0 0.0
    %1245 = vmatpush.msra.mxu0 0.0
    %1246 = vmatpush.msra.mxu0 0.0
    %1247 = vmatpush.msra.mxu0 0.0
    %1248 = vmatpush.msra.mxu0 0.0
    %1249 = vmatpush.msra.mxu0 0.0
    %1250 = vmatpush.msra.mxu0 0.0
    %1251 = vmatpush.msra.mxu0 0.0
    %1252 = vmatpush.msra.mxu0 0.0
    %1253 = vmatpush.msra.mxu0 0.0
    %1254 = vmatpush.msra.mxu0 0.0
    %1255 = vmatpush.msra.mxu0 %v815
    %1256 = vmatpush.msra.mxu0 %v814
    %1257 = vmatpush.msra.mxu0 %v813
    %1258 = vmatpush.msra.mxu0 %v812
    %1259 = vmatmul.f32.gmra.mxu0 %v1241
    %v1260 = vpop.f32.mrf.mxu0
    %v1261 = vadd.f32 0.0, %v1260
    %1262 = vdwg.mxu0
    %v1263 = vadd.f32 %v1237, %v1261
    %v1264 = vxor.u32 %v1263, 2147483648
    %v1265 = vmul.f32 %v1264, 1.442695
    %v1266 = vpow.pop %v1265
    %v1267 = vadd.f32 %v1266, 1.0
    %v1268 = vrcp.pop %v1267
    %v1269 = vmul.f32 %v1267, %v1268
    %v1270 = vsub.f32 1.0, %v1269
    %v1271 = vmul.f32 %v1268, %v1270
    %v1272 = vadd.f32 %v1268, %v1271
    %vm1273 = vweird.f32 %v1267
    %vm1274 = vweird.f32 %v1268
    %vm1275 = vmor %vm1273, %vm1274
    %v1276 = vsel %vm1275, %v1268, %v1272
    %v1277 = vand.u32 2147483647, %v1267
    %vm1278 = vcmp.eq.f32.partialorder %v1277, 8.507059e+37
    %v1279 = vand.u32 %v1267, 2147483648
    %v1280 = vor.u32 1.1754944e-38, %v1279
    %v1281 = vsel %vm1278, %v1280, %v1276
    %v1282 = vmul.f32 1.0, %v1281
    %v1283 = vtanh.pop %v1263
    %v1284 = vmul.f32 %v1282, %v1223
    %1286 = vrot.lane.b32.xlu0 %v1283, 64
    %v1287 = vpop.permute.xlu0 %1286
    %v1289 = vmul.f32 %v1282, %v1287
    %1291 = vrot.lane.b32.xlu0 %v1289, 32
    %v1292 = vpop.permute.xlu0 %1291
    %v1294 = vadd.f32 %v1284, %v1292
    %v1295 = vtanh.pop %v1294
    %1297 = vrot.lane.b32.xlu0 %v1295, 64
    %v1298 = vpop.permute.xlu0 %1297
    %v1300 = vmul.f32 %v1282, %v1298
    %vm1301 = vcmp.eq.s32.totalorder %v100, 7
    %v1302 = vsel %vm1301, 1, 0
    %1303 = vset.pattern.permute.xlu0 0
    %1304 = vperm.xlu0 %1303, %v1302
    %v1305 = vpop.permute.xlu0 %1304
    %vm1306 = vcmp.eq.s32.totalorder %v1305, 1
    %v1307 = vsel %vm1306, %v1300, %v1236
    %v1308 = vld [vmem:[#allocation3 + $0x38] sm:$0xff]
    %1310 = vrot.lane.b32.xlu0 %v1300, 32
    %v1311 = vpop.permute.xlu0 %1310
    %v1312 = vsel %vm194, %v1311, 0
    %1314 = vmatpush.msra.mxu0 0.0
    %1315 = vmatpush.msra.mxu0 0.0
    %1316 = vmatpush.msra.mxu0 0.0
    %1317 = vmatpush.msra.mxu0 0.0
    %1318 = vmatpush.msra.mxu0 0.0
    %1319 = vmatpush.msra.mxu0 0.0
    %1320 = vmatpush.msra.mxu0 0.0
    %1321 = vmatpush.msra.mxu0 0.0
    %1322 = vmatpush.msra.mxu0 0.0
    %1323 = vmatpush.msra.mxu0 0.0
    %1324 = vmatpush.msra.mxu0 0.0
    %1325 = vmatpush.msra.mxu0 0.0
    %1326 = vmatpush.msra.mxu0 %v815
    %1327 = vmatpush.msra.mxu0 %v814
    %1328 = vmatpush.msra.mxu0 %v813
    %1329 = vmatpush.msra.mxu0 %v812
    %1330 = vmatmul.f32.gmra.mxu0 %v1312
    %v1331 = vpop.f32.mrf.mxu0
    %v1332 = vadd.f32 0.0, %v1331
    %1333 = vdwg.mxu0
    %v1334 = vadd.f32 %v1308, %v1332
    %v1335 = vxor.u32 %v1334, 2147483648
    %v1336 = vmul.f32 %v1335, 1.442695
    %v1337 = vpow.pop %v1336
    %v1338 = vadd.f32 %v1337, 1.0
    %v1339 = vrcp.pop %v1338
    %v1340 = vmul.f32 %v1338, %v1339
    %v1341 = vsub.f32 1.0, %v1340
    %v1342 = vmul.f32 %v1339, %v1341
    %v1343 = vadd.f32 %v1339, %v1342
    %vm1344 = vweird.f32 %v1338
    %vm1345 = vweird.f32 %v1339
    %vm1346 = vmor %vm1344, %vm1345
    %v1347 = vsel %vm1346, %v1339, %v1343
    %v1348 = vand.u32 2147483647, %v1338
    %vm1349 = vcmp.eq.f32.partialorder %v1348, 8.507059e+37
    %v1350 = vand.u32 %v1338, 2147483648
    %v1351 = vor.u32 1.1754944e-38, %v1350
    %v1352 = vsel %vm1349, %v1351, %v1347
    %v1353 = vmul.f32 1.0, %v1352
    %v1354 = vtanh.pop %v1334
    %v1355 = vmul.f32 %v1353, %v1294
    %1357 = vrot.lane.b32.xlu0 %v1354, 64
    %v1358 = vpop.permute.xlu0 %1357
    %v1360 = vmul.f32 %v1353, %v1358
    %1362 = vrot.lane.b32.xlu0 %v1360, 32
    %v1363 = vpop.permute.xlu0 %1362
    %v1365 = vadd.f32 %v1355, %v1363
    %v1366 = vtanh.pop %v1365
    %1368 = vrot.lane.b32.xlu0 %v1366, 64
    %v1369 = vpop.permute.xlu0 %1368
    %v1371 = vmul.f32 %v1353, %v1369
    %vm1372 = vcmp.eq.s32.totalorder %v100, 8
    %v1373 = vsel %vm1372, 1, 0
    %1374 = vset.pattern.permute.xlu0 0
    %1375 = vperm.xlu0 %1374, %v1373
    %v1376 = vpop.permute.xlu0 %1375
    %vm1377 = vcmp.eq.s32.totalorder %v1376, 1
    %v1378 = vsel %vm1377, %v1371, %v1307
    %v1379 = vld [vmem:[%s8] sm:$0xff]
    %v1380 = vld [vmem:[%s8 + $0x8] sm:$0xff]
    %v1381 = vld [vmem:[%s8 + $0x10] sm:$0xff]
    %v1382 = vld [vmem:[%s8 + $0x18] sm:$0xff]
    %v1383 = vld [vmem:[#allocation4] sm:$0x1]
    %v1385 = vperm.slane %v1383, 0
    %1388 = vrot.lane.b32.xlu0 %v1378, 32
    %v1389 = vpop.permute.xlu0 %1388
    %v1390 = vsel %vm194, %v1389, 0
    %1392 = vmatpush.msra.mxu0 0.0
    %1393 = vmatpush.msra.mxu0 0.0
    %1394 = vmatpush.msra.mxu0 0.0
    %1395 = vmatpush.msra.mxu0 0.0
    %1396 = vmatpush.msra.mxu0 0.0
    %1397 = vmatpush.msra.mxu0 0.0
    %1398 = vmatpush.msra.mxu0 0.0
    %1399 = vmatpush.msra.mxu0 0.0
    %1400 = vmatpush.msra.mxu0 0.0
    %1401 = vmatpush.msra.mxu0 0.0
    %1402 = vmatpush.msra.mxu0 0.0
    %1403 = vmatpush.msra.mxu0 0.0
    %1404 = vmatpush.msra.mxu0 %v1382
    %1405 = vmatpush.msra.mxu0 %v1381
    %1406 = vmatpush.msra.mxu0 %v1380
    %1407 = vmatpush.msra.mxu0 %v1379
    %1408 = vmatmul.f32.gmra.mxu0 %v1390
    %v1409 = vpop.f32.mrf.mxu0
    %v1410 = vadd.f32 %v1385, %v1409
    %1411 = vdwg.mxu0
    %vm1412 = vcmask 7168
    %1413 = vst.msk [vmem:[%s10] sm:$0xff] %vm1412, %v1410
    // Predicated region
    $region58: #{tpu_custom_call.1} parent=1 // pred_check
      _
    $region59: #{tpu_custom_call.1} parent=1 // pred_check_branch
      %1415 = sbr.rel (0) target = $region61
    $region60: #{tpu_custom_call.1} parent=1 // pred_region
      _
    $region61: #{tpu_custom_call.1} parent=1 // pred_fallthru
      _
    // Predicated region
    $region62: #{tpu_custom_call.1} parent=1 // pred_check
      _
    $region63: #{tpu_custom_call.1} parent=1 // pred_check_branch
      %1417 = sbr.rel (0) target = $region65
    $region64: #{tpu_custom_call.1} parent=1 // pred_region
      _
    $region65: #{tpu_custom_call.1} parent=1 // pred_fallthru
      _
    %1418 = vsyncpa [#allocation6], 1
    %1419 = vsyncpa [#allocation8], 1
    %1420 = vsyncpa [#allocation11], 1

</llo_original>
